<compile_context>
chip_gen: v6e
topology: v6e:2x2x1
jax: 0.10.0
libtpu: 0.0.40
codegen_flags: <defaults>
</compile_context>

<pallas_src>
import functools

import jax
import jax.numpy as jnp
from jax.experimental import pallas as pl
from jax.experimental.pallas import tpu as pltpu


# ------------------------------------------------------------------
# Fused kernel: wavefront over (layer, time) + Linear + Softmax epilogue
# ------------------------------------------------------------------
def make_fused_kernel(num_layers, B, T, H, O):
    L = num_layers

    def kernel(*refs):
        x_ref, h0_ref = refs[0], refs[1]
        w_refs = refs[2:2 + 3 * L]            # per layer: wih_t, whh_t, bias(=b_ih+b_hh)
        wf_ref = refs[2 + 3 * L]              # (H, O)
        bf_ref = refs[3 + 3 * L]              # (1, O)
        o_ref = refs[4 + 3 * L]               # (B*T, O)  batch-major rows
        hT_ref = refs[5 + 3 * L]              # (L, B, H)
        y_ref = refs[6 + 3 * L]               # VMEM scratch (T*B, H), time-major rows

        # Hoist all weight/bias loads and the bias broadcast out of the recurrence.
        wih = [w_refs[3 * l][...] for l in range(L)]             # (in_l, H), MXU dtype
        whh = [w_refs[3 * l + 1][...] for l in range(L)]         # (H, H),   MXU dtype
        b_raw = [w_refs[3 * l + 2][...] for l in range(L)]       # (1, H) f32
        b_bcast = [jnp.broadcast_to(b, (B, H)) for b in b_raw]   # hoisted broadcasts
        mxu = wih[0].dtype                                       # bf16 fast / f32 exact

        # One-time time-major relayout of x (off the recurrent chain), then the layer-0
        # input projection as ONE GEMM with bias folded in once. Every per-step read in
        # the recurrence below is a contiguous 2-row slice of this slab.
        x = x_ref[...]                                           # (B, T, I)
        x_tm = jnp.concatenate([x[:, t, :] for t in range(T)], axis=0)   # (T*B, I)
        xw0 = jnp.dot(x_tm.astype(mxu), wih[0],
                      preferred_element_type=jnp.float32) + b_raw[0]     # (T*B, H) f32

        # Wavefront: step s runs layer l at time t = s - l (layers are independent within
        # a step, so the scheduler overlaps their matmul/tanh chains).
        h_state = [h0_ref[l] for l in range(L)]                  # (B, H) f32 each
        out_prev = [None] * L                                    # layer l output at latest step

        for s in range(T + L - 1):                               # static -> fully unrolled
            new_h = list(h_state)
            new_out = list(out_prev)
            for l in range(L):
                t = s - l
                if 0 <= t < T:
                    if l == 0:
                        xin = xw0[t * B:(t + 1) * B, :]          # contiguous, bias included
                    else:
                        xin = jnp.dot(out_prev[l - 1].astype(mxu), wih[l],
                                      preferred_element_type=jnp.float32) + b_bcast[l]
                    rec = jnp.dot(h_state[l].astype(mxu), whh[l],
                                  preferred_element_type=jnp.float32)
                    hl = jnp.tanh(xin + rec)
                    new_h[l] = hl
                    new_out[l] = hl
                    if l == L - 1:
                        # Last layer: spill to the VMEM slab (bounds vreg pressure,
                        # feeds the epilogue GEMM directly).
                        y_ref[pl.ds(t * B, B), :] = hl
            h_state, out_prev = new_h, new_out

        for l in range(L):
            hT_ref[l] = h_state[l]                               # final hidden, layer l

        # Epilogue: Linear + Softmax over the whole sequence in one GEMM.
        cur = y_ref[...]                                         # (T*B, H) time-major
        logits = jnp.dot(cur.astype(mxu), wf_ref[...],
                         preferred_element_type=jnp.float32) + bf_ref[...]
        m = jnp.max(logits, axis=-1, keepdims=True)
        e = jnp.exp(logits - m)
        # approx=True would use the otherwise-idle EUP vrcp, but its ~2.4e-4 relative
        # error threatens the 1e-4 matched-reference check; keep exact at O=8.
        probs = e * pl.reciprocal(jnp.sum(e, axis=-1, keepdims=True), approx=False)

        # Reorder the narrow (O-wide) slab time-major -> batch-major rows and write it
        # with a single slab-wide store; the wrapper reshape (B*T,O)->(B,T,O) is a no-op.
        probs3 = probs.reshape(T, B, O)
        o_ref[...] = jnp.concatenate([probs3[:, b, :] for b in range(B)], axis=0)

    return kernel


# ------------------------------------------------------------------
# Canonical parameter layout (done ONCE at init, never per forward call)
# ------------------------------------------------------------------
def canonicalize_params(params, num_layers, mxu_dtype=jnp.bfloat16):
    """Pre-transposed weights (MXU operand dtype) + pre-summed biases (f32)."""
    canon = {}
    for l in range(num_layers):
        canon[f"wih_t_{l}"] = jnp.transpose(params[f"w_ih_{l}"]).astype(mxu_dtype)
        canon[f"whh_t_{l}"] = jnp.transpose(params[f"w_hh_{l}"]).astype(mxu_dtype)
        canon[f"b_{l}"] = (params[f"b_ih_{l}"] + params[f"b_hh_{l}"])[None, :].astype(jnp.float32)
    canon["wf_t"] = jnp.transpose(params["w_f"]).astype(mxu_dtype)
    canon["bf"] = params["b_f"][None, :].astype(jnp.float32)
    return canon


# ------------------------------------------------------------------
# Forward wrapper: single gridless pallas_call, everything VMEM-resident
# ------------------------------------------------------------------
def rc_sense_model2_forward(x, h, canon, num_layers):
    B, T, I = x.shape
    H = h.shape[-1]
    O = canon["wf_t"].shape[1]

    inputs = [x, h]
    for l in range(num_layers):
        inputs += [canon[f"wih_t_{l}"], canon[f"whh_t_{l}"], canon[f"b_{l}"]]
    inputs += [canon["wf_t"], canon["bf"]]

    flops = 2 * B * T * (I * H                       # layer-0 input projection
                         + (num_layers - 1) * H * H  # later-layer input projections
                         + num_layers * H * H        # recurrent matmuls
                         + H * O)                    # final linear
    transcendentals = B * T * (num_layers * H + O)   # tanh + exp
    bytes_accessed = (sum(int(a.size) * a.dtype.itemsize for a in inputs)
                      + 4 * (B * T * O + num_layers * B * H))

    vmem = pl.BlockSpec(memory_space=pltpu.MemorySpace.VMEM)
    kernel = make_fused_kernel(num_layers, B, T, H, O)
    o_flat, h_out = pl.pallas_call(
        kernel,
        out_shape=(jax.ShapeDtypeStruct((B * T, O), jnp.float32),
                   jax.ShapeDtypeStruct((num_layers, B, H), jnp.float32)),
        in_specs=[vmem] * len(inputs),
        out_specs=(vmem, vmem),
        scratch_shapes=[pltpu.VMEM((T * B, H), jnp.float32)],
        cost_estimate=pl.CostEstimate(flops=flops,
                                      transcendentals=transcendentals,
                                      bytes_accessed=bytes_accessed),
    )(*inputs)
    # Row-major (B*T, O) -> (B, T, O): metadata-only reshape, no transpose / HBM copy.
    return o_flat.reshape(B, T, O), h_out


# ------------------------------------------------------------------
# References
# ------------------------------------------------------------------
def reference_forward(x, h, params, num_layers):
    """Pure-f32 JAX reference of the PyTorch module (exact semantics)."""
    B, T, _ = x.shape
    cur = x
    h_finals = []
    for l in range(num_layers):
        wih, whh = params[f"w_ih_{l}"], params[f"w_hh_{l}"]
        bih, bhh = params[f"b_ih_{l}"], params[f"b_hh_{l}"]
        ht = h[l]
        outs = []
        for t in range(T):
            ht = jnp.tanh(cur[:, t, :] @ wih.T + bih + ht @ whh.T + bhh)
            outs.append(ht)
        cur = jnp.stack(outs, axis=1)
        h_finals.append(ht)
    logits = cur @ params["w_f"].T + params["b_f"]
    probs = jax.nn.softmax(logits, axis=2)
    return probs, jnp.stack(h_finals, axis=0)


def matched_reference(x, h, canon, num_layers):
    """Plain-JAX reference with the SAME cast points as the kernel (bf16 MXU operands,
    f32 accumulation) — validates the kernel structure independently of the documented
    bf16-vs-f32 precision gap."""
    B, T, _ = x.shape
    mxu = canon["wf_t"].dtype
    cur = x
    h_finals = []
    for l in range(num_layers):
        wih_t, whh_t, b = canon[f"wih_t_{l}"], canon[f"whh_t_{l}"], canon[f"b_{l}"]
        ht = h[l]
        outs = []
        for t in range(T):
            xin = jnp.dot(cur[:, t, :].astype(mxu), wih_t,
                          preferred_element_type=jnp.float32) + b
            rec = jnp.dot(ht.astype(mxu), whh_t, preferred_element_type=jnp.float32)
            ht = jnp.tanh(xin + rec)
            outs.append(ht)
        cur = jnp.stack(outs, axis=1)
        h_finals.append(ht)
    H = cur.shape[-1]
    logits = jnp.dot(cur.reshape(B * T, H).astype(mxu), canon["wf_t"],
                     preferred_element_type=jnp.float32) + canon["bf"]
    probs = jax.nn.softmax(logits, axis=-1).reshape(B, T, -1)
    return probs, jnp.stack(h_finals, axis=0)


if __name__ == "__main__":
    # small shapes consistent with the module
    B, T = 2, 8
    ISZ, HSZ, OSZ, SSZ = 16, 32, 8, 2   # input, hidden, output, num_layers

    key = jax.random.PRNGKey(0)
    keys = jax.random.split(key, 4 * SSZ + 3)
    bound = 1.0 / float(HSZ) ** 0.5

    params = {}
    ki = 0
    for l in range(SSZ):
        in_l = ISZ if l == 0 else HSZ
        params[f"w_ih_{l}"] = jax.random.uniform(keys[ki], (HSZ, in_l), jnp.float32, -bound, bound); ki += 1
        params[f"w_hh_{l}"] = jax.random.uniform(keys[ki], (HSZ, HSZ), jnp.float32, -bound, bound); ki += 1
        params[f"b_ih_{l}"] = jax.random.uniform(keys[ki], (HSZ,), jnp.float32, -bound, bound); ki += 1
        params[f"b_hh_{l}"] = jax.random.uniform(keys[ki], (HSZ,), jnp.float32, -bound, bound); ki += 1
    params["w_f"] = jax.random.uniform(keys[ki], (OSZ, HSZ), jnp.float32, -bound, bound); ki += 1
    params["b_f"] = jax.random.uniform(keys[ki], (OSZ,), jnp.float32, -bound, bound); ki += 1

    x = jax.random.normal(keys[ki], (B, T, ISZ), jnp.float32)
    h0 = jnp.zeros((SSZ, B, HSZ), jnp.float32)   # (num_layers, B, hsz)

    fwd = jax.jit(functools.partial(rc_sense_model2_forward, num_layers=SSZ))

    # 1) Module-exact mode (f32 MXU operands): matches the pure-f32 reference at 1e-4.
    canon_f32 = canonicalize_params(params, SSZ, mxu_dtype=jnp.float32)
    o_f32, h_f32 = fwd(x, h0, canon_f32)
    jax.block_until_ready((o_f32, h_f32))
    o_ref, h_ref = reference_forward(x, h0, params, SSZ)
    assert o_f32.shape == (B, T, OSZ) and h_f32.shape == (SSZ, B, HSZ)
    assert jnp.allclose(o_f32, o_ref, atol=1e-4, rtol=1e-4)
    assert jnp.allclose(h_f32, h_ref, atol=1e-4, rtol=1e-4)

    # 2) Perf mode (bf16 MXU operands, f32 accumulation — the review's recommended
    #    config): matches the matched-precision JAX reference at 1e-4.
    canon_bf16 = canonicalize_params(params, SSZ, mxu_dtype=jnp.bfloat16)
    o_bf, h_bf = fwd(x, h0, canon_bf16)
    jax.block_until_ready((o_bf, h_bf))
    o_mref, h_mref = matched_reference(x, h0, canon_bf16, SSZ)
    assert o_bf.shape == (B, T, OSZ) and h_bf.shape == (SSZ, B, HSZ)
    assert jnp.allclose(o_bf, o_mref, atol=1e-4, rtol=1e-4)
    assert jnp.allclose(h_bf, h_mref, atol=1e-4, rtol=1e-4)

    print("KERNEL_OK")
</pallas_src>

<mosaic_0001>
module attributes {stable_mosaic.version = 11 : i64} {
  func.func @kernel(%arg0: memref<2x8x16xf32, #tpu.memory_space<vmem>>, %arg1: memref<2x2x32xf32, #tpu.memory_space<vmem>>, %arg2: memref<16x32xf32, #tpu.memory_space<vmem>>, %arg3: memref<32x32xf32, #tpu.memory_space<vmem>>, %arg4: memref<1x32xf32, #tpu.memory_space<vmem>>, %arg5: memref<32x32xf32, #tpu.memory_space<vmem>>, %arg6: memref<32x32xf32, #tpu.memory_space<vmem>>, %arg7: memref<1x32xf32, #tpu.memory_space<vmem>>, %arg8: memref<32x8xf32, #tpu.memory_space<vmem>>, %arg9: memref<1x8xf32, #tpu.memory_space<vmem>>, %arg10: memref<16x8xf32, #tpu.memory_space<vmem>>, %arg11: memref<2x2x32xf32, #tpu.memory_space<vmem>>, %arg12: memref<16x32xf32, #tpu.memory_space<vmem>>) attributes {dimension_semantics = [], scalar_prefetch = 0 : i64, scratch_operands = 1 : i64, tpu.core_type = #tpu.core_type<tc>} {
    %c0 = arith.constant 0 : index
    %c0_0 = arith.constant 0 : index
    %0 = vector.load %arg2[%c0, %c0_0] : memref<16x32xf32, #tpu.memory_space<vmem>>, vector<16x32xf32>
    %c0_1 = arith.constant 0 : index
    %c0_2 = arith.constant 0 : index
    %1 = vector.load %arg5[%c0_1, %c0_2] : memref<32x32xf32, #tpu.memory_space<vmem>>, vector<32x32xf32>
    %c0_3 = arith.constant 0 : index
    %c0_4 = arith.constant 0 : index
    %2 = vector.load %arg3[%c0_3, %c0_4] : memref<32x32xf32, #tpu.memory_space<vmem>>, vector<32x32xf32>
    %c0_5 = arith.constant 0 : index
    %c0_6 = arith.constant 0 : index
    %3 = vector.load %arg6[%c0_5, %c0_6] : memref<32x32xf32, #tpu.memory_space<vmem>>, vector<32x32xf32>
    %c0_7 = arith.constant 0 : index
    %c0_8 = arith.constant 0 : index
    %4 = vector.load %arg4[%c0_7, %c0_8] : memref<1x32xf32, #tpu.memory_space<vmem>>, vector<1x32xf32>
    %c0_9 = arith.constant 0 : index
    %c0_10 = arith.constant 0 : index
    %5 = vector.load %arg7[%c0_9, %c0_10] : memref<1x32xf32, #tpu.memory_space<vmem>>, vector<1x32xf32>
    %6 = vector.shape_cast %5 : vector<1x32xf32> to vector<1x32xf32>
    %7 = vector.broadcast %6 : vector<1x32xf32> to vector<2x32xf32>
    %c0_11 = arith.constant 0 : index
    %c0_12 = arith.constant 0 : index
    %c0_13 = arith.constant 0 : index
    %8 = vector.load %arg0[%c0_11, %c0_12, %c0_13] : memref<2x8x16xf32, #tpu.memory_space<vmem>>, vector<2x8x16xf32>
    %9 = vector.extract_strided_slice %8 {offsets = [0, 0, 0], sizes = [2, 1, 16], strides = [1, 1, 1]} : vector<2x8x16xf32> to vector<2x1x16xf32>
    %10 = vector.shape_cast %9 : vector<2x1x16xf32> to vector<2x16xf32>
    %11 = vector.extract_strided_slice %8 {offsets = [0, 1, 0], sizes = [2, 1, 16], strides = [1, 1, 1]} : vector<2x8x16xf32> to vector<2x1x16xf32>
    %12 = vector.shape_cast %11 : vector<2x1x16xf32> to vector<2x16xf32>
    %13 = vector.extract_strided_slice %8 {offsets = [0, 2, 0], sizes = [2, 1, 16], strides = [1, 1, 1]} : vector<2x8x16xf32> to vector<2x1x16xf32>
    %14 = vector.shape_cast %13 : vector<2x1x16xf32> to vector<2x16xf32>
    %15 = vector.extract_strided_slice %8 {offsets = [0, 3, 0], sizes = [2, 1, 16], strides = [1, 1, 1]} : vector<2x8x16xf32> to vector<2x1x16xf32>
    %16 = vector.shape_cast %15 : vector<2x1x16xf32> to vector<2x16xf32>
    %17 = vector.extract_strided_slice %8 {offsets = [0, 4, 0], sizes = [2, 1, 16], strides = [1, 1, 1]} : vector<2x8x16xf32> to vector<2x1x16xf32>
    %18 = vector.shape_cast %17 : vector<2x1x16xf32> to vector<2x16xf32>
    %19 = vector.extract_strided_slice %8 {offsets = [0, 5, 0], sizes = [2, 1, 16], strides = [1, 1, 1]} : vector<2x8x16xf32> to vector<2x1x16xf32>
    %20 = vector.shape_cast %19 : vector<2x1x16xf32> to vector<2x16xf32>
    %21 = vector.extract_strided_slice %8 {offsets = [0, 6, 0], sizes = [2, 1, 16], strides = [1, 1, 1]} : vector<2x8x16xf32> to vector<2x1x16xf32>
    %22 = vector.shape_cast %21 : vector<2x1x16xf32> to vector<2x16xf32>
    %23 = vector.extract_strided_slice %8 {offsets = [0, 7, 0], sizes = [2, 1, 16], strides = [1, 1, 1]} : vector<2x8x16xf32> to vector<2x1x16xf32>
    %24 = vector.shape_cast %23 : vector<2x1x16xf32> to vector<2x16xf32>
    %25 = tpu.concatenate %10, %12, %14, %16, %18, %20, %22, %24 in 0 : vector<2x16xf32>, vector<2x16xf32>, vector<2x16xf32>, vector<2x16xf32>, vector<2x16xf32>, vector<2x16xf32>, vector<2x16xf32>, vector<2x16xf32> -> vector<16x16xf32>
    %cst = arith.constant dense<0.000000e+00> : vector<16x32xf32>
    %26 = tpu.matmul %25, %0, %cst {dimension_numbers = #tpu.dot_dimension_numbers<[1], [0], [0], [1], [0, 0, 1, 1], [], []>} : vector<16x16xf32>, vector<16x32xf32>, vector<16x32xf32> -> vector<16x32xf32>
    %27 = vector.broadcast %4 : vector<1x32xf32> to vector<16x32xf32>
    %28 = arith.addf %26, %27 : vector<16x32xf32>
    %c0_14 = arith.constant 0 : index
    %c0_15 = arith.constant 0 : index
    %c0_16 = arith.constant 0 : index
    %29 = vector.load %arg1[%c0_14, %c0_15, %c0_16] : memref<2x2x32xf32, #tpu.memory_space<vmem>>, vector<1x2x32xf32>
    %30 = vector.shape_cast %29 : vector<1x2x32xf32> to vector<2x32xf32>
    %c1 = arith.constant 1 : index
    %c0_17 = arith.constant 0 : index
    %c0_18 = arith.constant 0 : index
    %31 = vector.load %arg1[%c1, %c0_17, %c0_18] : memref<2x2x32xf32, #tpu.memory_space<vmem>>, vector<1x2x32xf32>
    %32 = vector.shape_cast %31 : vector<1x2x32xf32> to vector<2x32xf32>
    %33 = vector.extract_strided_slice %28 {offsets = [0, 0], sizes = [2, 32], strides = [1, 1]} : vector<16x32xf32> to vector<2x32xf32>
    %cst_19 = arith.constant dense<0.000000e+00> : vector<2x32xf32>
    %34 = tpu.matmul %30, %2, %cst_19 {dimension_numbers = #tpu.dot_dimension_numbers<[1], [0], [0], [1], [0, 0, 1, 1], [], []>} : vector<2x32xf32>, vector<32x32xf32>, vector<2x32xf32> -> vector<2x32xf32>
    %35 = arith.addf %33, %34 : vector<2x32xf32>
    %36 = math.tanh %35 : vector<2x32xf32>
    %37 = vector.extract_strided_slice %28 {offsets = [2, 0], sizes = [2, 32], strides = [1, 1]} : vector<16x32xf32> to vector<2x32xf32>
    %cst_20 = arith.constant dense<0.000000e+00> : vector<2x32xf32>
    %38 = tpu.matmul %36, %2, %cst_20 {dimension_numbers = #tpu.dot_dimension_numbers<[1], [0], [0], [1], [0, 0, 1, 1], [], []>} : vector<2x32xf32>, vector<32x32xf32>, vector<2x32xf32> -> vector<2x32xf32>
    %39 = arith.addf %37, %38 : vector<2x32xf32>
    %40 = math.tanh %39 : vector<2x32xf32>
    %cst_21 = arith.constant dense<0.000000e+00> : vector<2x32xf32>
    %41 = tpu.matmul %36, %1, %cst_21 {dimension_numbers = #tpu.dot_dimension_numbers<[1], [0], [0], [1], [0, 0, 1, 1], [], []>} : vector<2x32xf32>, vector<32x32xf32>, vector<2x32xf32> -> vector<2x32xf32>
    %42 = arith.addf %41, %7 : vector<2x32xf32>
    %cst_22 = arith.constant dense<0.000000e+00> : vector<2x32xf32>
    %43 = tpu.matmul %32, %3, %cst_22 {dimension_numbers = #tpu.dot_dimension_numbers<[1], [0], [0], [1], [0, 0, 1, 1], [], []>} : vector<2x32xf32>, vector<32x32xf32>, vector<2x32xf32> -> vector<2x32xf32>
    %44 = arith.addf %42, %43 : vector<2x32xf32>
    %45 = math.tanh %44 : vector<2x32xf32>
    %c0_23 = arith.constant 0 : index
    %c0_24 = arith.constant 0 : index
    %46 = vector.load %arg12[%c0_23, %c0_24] : memref<16x32xf32, #tpu.memory_space<vmem>>, vector<2x32xf32>
    tpu.vector_store %arg12[%c0_23, %c0_24], %45 {strides = array<i32>} : memref<16x32xf32, #tpu.memory_space<vmem>>, vector<2x32xf32>,
    %47 = vector.extract_strided_slice %28 {offsets = [4, 0], sizes = [2, 32], strides = [1, 1]} : vector<16x32xf32> to vector<2x32xf32>
    %cst_25 = arith.constant dense<0.000000e+00> : vector<2x32xf32>
    %48 = tpu.matmul %40, %2, %cst_25 {dimension_numbers = #tpu.dot_dimension_numbers<[1], [0], [0], [1], [0, 0, 1, 1], [], []>} : vector<2x32xf32>, vector<32x32xf32>, vector<2x32xf32> -> vector<2x32xf32>
    %49 = arith.addf %47, %48 : vector<2x32xf32>
    %50 = math.tanh %49 : vector<2x32xf32>
    %cst_26 = arith.constant dense<0.000000e+00> : vector<2x32xf32>
    %51 = tpu.matmul %40, %1, %cst_26 {dimension_numbers = #tpu.dot_dimension_numbers<[1], [0], [0], [1], [0, 0, 1, 1], [], []>} : vector<2x32xf32>, vector<32x32xf32>, vector<2x32xf32> -> vector<2x32xf32>
    %52 = arith.addf %51, %7 : vector<2x32xf32>
    %cst_27 = arith.constant dense<0.000000e+00> : vector<2x32xf32>
    %53 = tpu.matmul %45, %3, %cst_27 {dimension_numbers = #tpu.dot_dimension_numbers<[1], [0], [0], [1], [0, 0, 1, 1], [], []>} : vector<2x32xf32>, vector<32x32xf32>, vector<2x32xf32> -> vector<2x32xf32>
    %54 = arith.addf %52, %53 : vector<2x32xf32>
    %55 = math.tanh %54 : vector<2x32xf32>
    %c2 = arith.constant 2 : index
    %c0_28 = arith.constant 0 : index
    %56 = vector.load %arg12[%c2, %c0_28] : memref<16x32xf32, #tpu.memory_space<vmem>>, vector<2x32xf32>
    tpu.vector_store %arg12[%c2, %c0_28], %55 {strides = array<i32>} : memref<16x32xf32, #tpu.memory_space<vmem>>, vector<2x32xf32>,
    %57 = vector.extract_strided_slice %28 {offsets = [6, 0], sizes = [2, 32], strides = [1, 1]} : vector<16x32xf32> to vector<2x32xf32>
    %cst_29 = arith.constant dense<0.000000e+00> : vector<2x32xf32>
    %58 = tpu.matmul %50, %2, %cst_29 {dimension_numbers = #tpu.dot_dimension_numbers<[1], [0], [0], [1], [0, 0, 1, 1], [], []>} : vector<2x32xf32>, vector<32x32xf32>, vector<2x32xf32> -> vector<2x32xf32>
    %59 = arith.addf %57, %58 : vector<2x32xf32>
    %60 = math.tanh %59 : vector<2x32xf32>
    %cst_30 = arith.constant dense<0.000000e+00> : vector<2x32xf32>
    %61 = tpu.matmul %50, %1, %cst_30 {dimension_numbers = #tpu.dot_dimension_numbers<[1], [0], [0], [1], [0, 0, 1, 1], [], []>} : vector<2x32xf32>, vector<32x32xf32>, vector<2x32xf32> -> vector<2x32xf32>
    %62 = arith.addf %61, %7 : vector<2x32xf32>
    %cst_31 = arith.constant dense<0.000000e+00> : vector<2x32xf32>
    %63 = tpu.matmul %55, %3, %cst_31 {dimension_numbers = #tpu.dot_dimension_numbers<[1], [0], [0], [1], [0, 0, 1, 1], [], []>} : vector<2x32xf32>, vector<32x32xf32>, vector<2x32xf32> -> vector<2x32xf32>
    %64 = arith.addf %62, %63 : vector<2x32xf32>
    %65 = math.tanh %64 : vector<2x32xf32>
    %c4 = arith.constant 4 : index
    %c0_32 = arith.constant 0 : index
    %66 = vector.load %arg12[%c4, %c0_32] : memref<16x32xf32, #tpu.memory_space<vmem>>, vector<2x32xf32>
    tpu.vector_store %arg12[%c4, %c0_32], %65 {strides = array<i32>} : memref<16x32xf32, #tpu.memory_space<vmem>>, vector<2x32xf32>,
    %67 = vector.extract_strided_slice %28 {offsets = [8, 0], sizes = [2, 32], strides = [1, 1]} : vector<16x32xf32> to vector<2x32xf32>
    %cst_33 = arith.constant dense<0.000000e+00> : vector<2x32xf32>
    %68 = tpu.matmul %60, %2, %cst_33 {dimension_numbers = #tpu.dot_dimension_numbers<[1], [0], [0], [1], [0, 0, 1, 1], [], []>} : vector<2x32xf32>, vector<32x32xf32>, vector<2x32xf32> -> vector<2x32xf32>
    %69 = arith.addf %67, %68 : vector<2x32xf32>
    %70 = math.tanh %69 : vector<2x32xf32>
    %cst_34 = arith.constant dense<0.000000e+00> : vector<2x32xf32>
    %71 = tpu.matmul %60, %1, %cst_34 {dimension_numbers = #tpu.dot_dimension_numbers<[1], [0], [0], [1], [0, 0, 1, 1], [], []>} : vector<2x32xf32>, vector<32x32xf32>, vector<2x32xf32> -> vector<2x32xf32>
    %72 = arith.addf %71, %7 : vector<2x32xf32>
    %cst_35 = arith.constant dense<0.000000e+00> : vector<2x32xf32>
    %73 = tpu.matmul %65, %3, %cst_35 {dimension_numbers = #tpu.dot_dimension_numbers<[1], [0], [0], [1], [0, 0, 1, 1], [], []>} : vector<2x32xf32>, vector<32x32xf32>, vector<2x32xf32> -> vector<2x32xf32>
    %74 = arith.addf %72, %73 : vector<2x32xf32>
    %75 = math.tanh %74 : vector<2x32xf32>
    %c6 = arith.constant 6 : index
    %c0_36 = arith.constant 0 : index
    %76 = vector.load %arg12[%c6, %c0_36] : memref<16x32xf32, #tpu.memory_space<vmem>>, vector<2x32xf32>
    tpu.vector_store %arg12[%c6, %c0_36], %75 {strides = array<i32>} : memref<16x32xf32, #tpu.memory_space<vmem>>, vector<2x32xf32>,
    %77 = vector.extract_strided_slice %28 {offsets = [10, 0], sizes = [2, 32], strides = [1, 1]} : vector<16x32xf32> to vector<2x32xf32>
    %cst_37 = arith.constant dense<0.000000e+00> : vector<2x32xf32>
    %78 = tpu.matmul %70, %2, %cst_37 {dimension_numbers = #tpu.dot_dimension_numbers<[1], [0], [0], [1], [0, 0, 1, 1], [], []>} : vector<2x32xf32>, vector<32x32xf32>, vector<2x32xf32> -> vector<2x32xf32>
    %79 = arith.addf %77, %78 : vector<2x32xf32>
    %80 = math.tanh %79 : vector<2x32xf32>
    %cst_38 = arith.constant dense<0.000000e+00> : vector<2x32xf32>
    %81 = tpu.matmul %70, %1, %cst_38 {dimension_numbers = #tpu.dot_dimension_numbers<[1], [0], [0], [1], [0, 0, 1, 1], [], []>} : vector<2x32xf32>, vector<32x32xf32>, vector<2x32xf32> -> vector<2x32xf32>
    %82 = arith.addf %81, %7 : vector<2x32xf32>
    %cst_39 = arith.constant dense<0.000000e+00> : vector<2x32xf32>
    %83 = tpu.matmul %75, %3, %cst_39 {dimension_numbers = #tpu.dot_dimension_numbers<[1], [0], [0], [1], [0, 0, 1, 1], [], []>} : vector<2x32xf32>, vector<32x32xf32>, vector<2x32xf32> -> vector<2x32xf32>
    %84 = arith.addf %82, %83 : vector<2x32xf32>
    %85 = math.tanh %84 : vector<2x32xf32>
    %c8 = arith.constant 8 : index
    %c0_40 = arith.constant 0 : index
    %86 = vector.load %arg12[%c8, %c0_40] : memref<16x32xf32, #tpu.memory_space<vmem>>, vector<2x32xf32>
    tpu.vector_store %arg12[%c8, %c0_40], %85 {strides = array<i32>} : memref<16x32xf32, #tpu.memory_space<vmem>>, vector<2x32xf32>,
    %87 = vector.extract_strided_slice %28 {offsets = [12, 0], sizes = [2, 32], strides = [1, 1]} : vector<16x32xf32> to vector<2x32xf32>
    %cst_41 = arith.constant dense<0.000000e+00> : vector<2x32xf32>
    %88 = tpu.matmul %80, %2, %cst_41 {dimension_numbers = #tpu.dot_dimension_numbers<[1], [0], [0], [1], [0, 0, 1, 1], [], []>} : vector<2x32xf32>, vector<32x32xf32>, vector<2x32xf32> -> vector<2x32xf32>
    %89 = arith.addf %87, %88 : vector<2x32xf32>
    %90 = math.tanh %89 : vector<2x32xf32>
    %cst_42 = arith.constant dense<0.000000e+00> : vector<2x32xf32>
    %91 = tpu.matmul %80, %1, %cst_42 {dimension_numbers = #tpu.dot_dimension_numbers<[1], [0], [0], [1], [0, 0, 1, 1], [], []>} : vector<2x32xf32>, vector<32x32xf32>, vector<2x32xf32> -> vector<2x32xf32>
    %92 = arith.addf %91, %7 : vector<2x32xf32>
    %cst_43 = arith.constant dense<0.000000e+00> : vector<2x32xf32>
    %93 = tpu.matmul %85, %3, %cst_43 {dimension_numbers = #tpu.dot_dimension_numbers<[1], [0], [0], [1], [0, 0, 1, 1], [], []>} : vector<2x32xf32>, vector<32x32xf32>, vector<2x32xf32> -> vector<2x32xf32>
    %94 = arith.addf %92, %93 : vector<2x32xf32>
    %95 = math.tanh %94 : vector<2x32xf32>
    %c10 = arith.constant 10 : index
    %c0_44 = arith.constant 0 : index
    %96 = vector.load %arg12[%c10, %c0_44] : memref<16x32xf32, #tpu.memory_space<vmem>>, vector<2x32xf32>
    tpu.vector_store %arg12[%c10, %c0_44], %95 {strides = array<i32>} : memref<16x32xf32, #tpu.memory_space<vmem>>, vector<2x32xf32>,
    %97 = vector.extract_strided_slice %28 {offsets = [14, 0], sizes = [2, 32], strides = [1, 1]} : vector<16x32xf32> to vector<2x32xf32>
    %cst_45 = arith.constant dense<0.000000e+00> : vector<2x32xf32>
    %98 = tpu.matmul %90, %2, %cst_45 {dimension_numbers = #tpu.dot_dimension_numbers<[1], [0], [0], [1], [0, 0, 1, 1], [], []>} : vector<2x32xf32>, vector<32x32xf32>, vector<2x32xf32> -> vector<2x32xf32>
    %99 = arith.addf %97, %98 : vector<2x32xf32>
    %100 = math.tanh %99 : vector<2x32xf32>
    %cst_46 = arith.constant dense<0.000000e+00> : vector<2x32xf32>
    %101 = tpu.matmul %90, %1, %cst_46 {dimension_numbers = #tpu.dot_dimension_numbers<[1], [0], [0], [1], [0, 0, 1, 1], [], []>} : vector<2x32xf32>, vector<32x32xf32>, vector<2x32xf32> -> vector<2x32xf32>
    %102 = arith.addf %101, %7 : vector<2x32xf32>
    %cst_47 = arith.constant dense<0.000000e+00> : vector<2x32xf32>
    %103 = tpu.matmul %95, %3, %cst_47 {dimension_numbers = #tpu.dot_dimension_numbers<[1], [0], [0], [1], [0, 0, 1, 1], [], []>} : vector<2x32xf32>, vector<32x32xf32>, vector<2x32xf32> -> vector<2x32xf32>
    %104 = arith.addf %102, %103 : vector<2x32xf32>
    %105 = math.tanh %104 : vector<2x32xf32>
    %c12 = arith.constant 12 : index
    %c0_48 = arith.constant 0 : index
    %106 = vector.load %arg12[%c12, %c0_48] : memref<16x32xf32, #tpu.memory_space<vmem>>, vector<2x32xf32>
    tpu.vector_store %arg12[%c12, %c0_48], %105 {strides = array<i32>} : memref<16x32xf32, #tpu.memory_space<vmem>>, vector<2x32xf32>,
    %cst_49 = arith.constant dense<0.000000e+00> : vector<2x32xf32>
    %107 = tpu.matmul %100, %1, %cst_49 {dimension_numbers = #tpu.dot_dimension_numbers<[1], [0], [0], [1], [0, 0, 1, 1], [], []>} : vector<2x32xf32>, vector<32x32xf32>, vector<2x32xf32> -> vector<2x32xf32>
    %108 = arith.addf %107, %7 : vector<2x32xf32>
    %cst_50 = arith.constant dense<0.000000e+00> : vector<2x32xf32>
    %109 = tpu.matmul %105, %3, %cst_50 {dimension_numbers = #tpu.dot_dimension_numbers<[1], [0], [0], [1], [0, 0, 1, 1], [], []>} : vector<2x32xf32>, vector<32x32xf32>, vector<2x32xf32> -> vector<2x32xf32>
    %110 = arith.addf %108, %109 : vector<2x32xf32>
    %111 = math.tanh %110 : vector<2x32xf32>
    %c14 = arith.constant 14 : index
    %c0_51 = arith.constant 0 : index
    %112 = vector.load %arg12[%c14, %c0_51] : memref<16x32xf32, #tpu.memory_space<vmem>>, vector<2x32xf32>
    tpu.vector_store %arg12[%c14, %c0_51], %111 {strides = array<i32>} : memref<16x32xf32, #tpu.memory_space<vmem>>, vector<2x32xf32>,
    %c0_52 = arith.constant 0 : index
    %c0_53 = arith.constant 0 : index
    %c0_54 = arith.constant 0 : index
    %113 = vector.load %arg11[%c0_52, %c0_53, %c0_54] : memref<2x2x32xf32, #tpu.memory_space<vmem>>, vector<1x2x32xf32>
    %114 = vector.shape_cast %113 : vector<1x2x32xf32> to vector<2x32xf32>
    %115 = vector.shape_cast %100 : vector<2x32xf32> to vector<1x2x32xf32>
    tpu.vector_store %arg11[%c0_52, %c0_53, %c0_54], %115 {strides = array<i32>} : memref<2x2x32xf32, #tpu.memory_space<vmem>>, vector<1x2x32xf32>,
    %c1_55 = arith.constant 1 : index
    %c0_56 = arith.constant 0 : index
    %c0_57 = arith.constant 0 : index
    %116 = vector.load %arg11[%c1_55, %c0_56, %c0_57] : memref<2x2x32xf32, #tpu.memory_space<vmem>>, vector<1x2x32xf32>
    %117 = vector.shape_cast %116 : vector<1x2x32xf32> to vector<2x32xf32>
    %118 = vector.shape_cast %111 : vector<2x32xf32> to vector<1x2x32xf32>
    tpu.vector_store %arg11[%c1_55, %c0_56, %c0_57], %118 {strides = array<i32>} : memref<2x2x32xf32, #tpu.memory_space<vmem>>, vector<1x2x32xf32>,
    %c0_58 = arith.constant 0 : index
    %c0_59 = arith.constant 0 : index
    %119 = vector.load %arg12[%c0_58, %c0_59] : memref<16x32xf32, #tpu.memory_space<vmem>>, vector<16x32xf32>
    %c0_60 = arith.constant 0 : index
    %c0_61 = arith.constant 0 : index
    %120 = vector.load %arg8[%c0_60, %c0_61] : memref<32x8xf32, #tpu.memory_space<vmem>>, vector<32x8xf32>
    %cst_62 = arith.constant dense<0.000000e+00> : vector<16x8xf32>
    %121 = tpu.matmul %119, %120, %cst_62 {dimension_numbers = #tpu.dot_dimension_numbers<[1], [0], [0], [1], [0, 0, 1, 1], [], []>} : vector<16x32xf32>, vector<32x8xf32>, vector<16x8xf32> -> vector<16x8xf32>
    %c0_63 = arith.constant 0 : index
    %c0_64 = arith.constant 0 : index
    %122 = vector.load %arg9[%c0_63, %c0_64] : memref<1x8xf32, #tpu.memory_space<vmem>>, vector<1x8xf32>
    %123 = vector.broadcast %122 : vector<1x8xf32> to vector<16x8xf32>
    %124 = arith.addf %121, %123 : vector<16x8xf32>
    %cst_65 = arith.constant dense<0xFF800000> : vector<16xf32>
    %125 = vector.multi_reduction <maximumf>, %124, %cst_65 [1] : vector<16x8xf32> to vector<16xf32>
    %126 = vector.shape_cast %125 : vector<16xf32> to vector<16x1xf32>
    %127 = vector.broadcast %126 : vector<16x1xf32> to vector<16x8xf32>
    %128 = arith.subf %124, %127 : vector<16x8xf32>
    %129 = math.exp %128 : vector<16x8xf32>
    %cst_66 = arith.constant dense<0.000000e+00> : vector<16xf32>
    %130 = vector.multi_reduction <add>, %129, %cst_66 [1] : vector<16x8xf32> to vector<16xf32>
    %131 = vector.shape_cast %130 : vector<16xf32> to vector<16x1xf32>
    %132 = tpu.reciprocal %131 : vector<16x1xf32> -> vector<16x1xf32>
    %133 = vector.broadcast %132 : vector<16x1xf32> to vector<16x8xf32>
    %134 = arith.mulf %129, %133 : vector<16x8xf32>
    %135 = vector.shape_cast %134 : vector<16x8xf32> to vector<8x2x8xf32>
    %136 = vector.extract_strided_slice %135 {offsets = [0, 0, 0], sizes = [8, 1, 8], strides = [1, 1, 1]} : vector<8x2x8xf32> to vector<8x1x8xf32>
    %137 = vector.shape_cast %136 : vector<8x1x8xf32> to vector<8x8xf32>
    %138 = vector.extract_strided_slice %135 {offsets = [0, 1, 0], sizes = [8, 1, 8], strides = [1, 1, 1]} : vector<8x2x8xf32> to vector<8x1x8xf32>
    %139 = vector.shape_cast %138 : vector<8x1x8xf32> to vector<8x8xf32>
    %140 = tpu.concatenate %137, %139 in 0 : vector<8x8xf32>, vector<8x8xf32> -> vector<16x8xf32>
    %c0_67 = arith.constant 0 : index
    %c0_68 = arith.constant 0 : index
    %141 = vector.load %arg10[%c0_67, %c0_68] : memref<16x8xf32, #tpu.memory_space<vmem>>, vector<16x8xf32>
    tpu.vector_store %arg10[%c0_67, %c0_68], %140 {strides = array<i32>} : memref<16x8xf32, #tpu.memory_space<vmem>>, vector<16x8xf32>,
    return
  }
}

</mosaic_0001>

<llo_original>
// kernel: rc_sense_model2_forward.1
$region0: #{rc_sense_model2_forward.1}
  #allocation0 [shape = 'u32[]', space=smem, size = 0x4, offset = 0x4, fixed_abs, tag = 'smem constant byte address 0x4 - core index']
  #allocation1 [shape = 'u32[144,128]{1,0:T(1,128)}', space=vmem, size = 0x12000, scoped, tag = 'internal scratch']
  #allocation2 [shape = 'f32[16,32]{1,0:T(8,128)}', space=vmem, size = 0x2000, scoped, tag = 'scratch operand']
  %s0 = inlined_call_operand.vmem [shape: f32[2,8,16], index: 0, kind: input, shape index: {}]
  %s1 = inlined_call_operand.hbm [shape: f32[2,2,32], index: 1, kind: input, shape index: {}]
  %s2 = inlined_call_operand.hbm [shape: f32[16,32], index: 2, kind: input, shape index: {}]
  %s3 = inlined_call_operand.vmem [shape: f32[32,32], index: 3, kind: input, shape index: {}]
  %s4 = inlined_call_operand.vmem [shape: f32[1,32], index: 4, kind: input, shape index: {}]
  %s5 = inlined_call_operand.hbm [shape: f32[32,32], index: 5, kind: input, shape index: {}]
  %s6 = inlined_call_operand.hbm [shape: f32[32,32], index: 6, kind: input, shape index: {}]
  %s7 = inlined_call_operand.vmem [shape: f32[1,32], index: 7, kind: input, shape index: {}]
  %s8 = inlined_call_operand.vmem [shape: f32[32,8], index: 8, kind: input, shape index: {}]
  %s9 = inlined_call_operand.hbm [shape: f32[1,8], index: 9, kind: input, shape index: {}]
  %s10 = inlined_call_operand.hbm [shape: f32[16,8], index: 10, kind: output, shape index: {0}]
  %s11 = inlined_call_operand.hbm [shape: f32[2,2,32], index: 11, kind: output, shape index: {1}]
  %12 = xla_tuple %s10, %s11
  %s13 = sld [smem:[#allocation0]]
  $region78: #{rc_sense_model2_forward.1} parent=0
    _
  %s15 = ssub.s32 1, %s13
  %s16 = scalar_select 0, %s15, %s13
  $region1: #{rc_sense_model2_forward.1} parent=0
    #allocation3 [shape = 'u8[2048]{0}', space=vmem, size = 0x800, scoped, tag = 'input window, operand 1, single buffered']
    #allocation4 [shape = 's32[1]{0}', space=sflag, size = 0x4, scoped, tag = 'scoped memory for rc_sense_model2_forward.1']
    #allocation5 [shape = 's32[1]{0}', space=sflag, size = 0x4, scoped, tag = 'scoped memory for rc_sense_model2_forward.1']
    #allocation6 [shape = 'u8[8192]{0}', space=vmem, size = 0x2000, scoped, tag = 'input window, operand 2, single buffered']
    #allocation7 [shape = 's32[1]{0}', space=sflag, size = 0x4, scoped, tag = 'scoped memory for rc_sense_model2_forward.1']
    #allocation8 [shape = 'u8[16384]{0}', space=vmem, size = 0x4000, scoped, tag = 'input window, operand 5, single buffered']
    #allocation9 [shape = 'u8[16384]{0}', space=vmem, size = 0x4000, scoped, tag = 'input window, operand 6, single buffered']
    #allocation10 [shape = 's32[1]{0}', space=sflag, size = 0x4, scoped, tag = 'scoped memory for rc_sense_model2_forward.1']
    #allocation11 [shape = 'u8[512]{0}', space=vmem, size = 0x400, scoped, tag = 'input window, operand 9, single buffered']
    #allocation12 [shape = 'u8[8192]{0}', space=vmem, size = 0x2000, scoped, tag = 'output window, operand 0, single buffered']
    #allocation13 [shape = 'u8[2048]{0}', space=vmem, size = 0x800, scoped, tag = 'output window, operand 1, single buffered']
    #allocation14 [shape = 's32[1]{0}', space=sflag, size = 0x4, scoped, tag = 'scoped memory for rc_sense_model2_forward.1']
    %17 = vsyncpa [#allocation4], 0
    %18 = vsyncpa [#allocation7], 0
    %19 = vsyncpa [#allocation10], 0
    %20 = vsyncpa [#allocation5], 0
    %21 = vsyncpa [#allocation14], 0
    // Predicated region
    $region2: #{rc_sense_model2_forward.1} parent=1 // pred_check
      _
    $region3: #{rc_sense_model2_forward.1} parent=1 // pred_check_branch
      %23 = sbr.rel (0) target = $region5
    $region4: #{rc_sense_model2_forward.1} parent=1 // pred_region
      _
    $region5: #{rc_sense_model2_forward.1} parent=1 // pred_fallthru
      _
    // Predicated region
    $region6: #{rc_sense_model2_forward.1} parent=1 // pred_check
      _
    $region7: #{rc_sense_model2_forward.1} parent=1 // pred_check_branch
      %25 = sbr.rel (0) target = $region9
    $region8: #{rc_sense_model2_forward.1} parent=1 // pred_region
      %s27 = ssub.s32 64, 64
      %28 = vsyncadd [#allocation4], %s27
      %s29 = sshll.u32 [#allocation3], 4
      %s30 = int_to_ptr.vmem [resolvable:$true] %s29
      %35 = dma.hbm_to_vmem [thread:$0]  %s1, 64, %s30, [#allocation4], 32, 32, 2
    $region9: #{rc_sense_model2_forward.1} parent=1 // pred_fallthru
      _
    // Predicated region
    $region10: #{rc_sense_model2_forward.1} parent=1 // pred_check
      _
    $region11: #{rc_sense_model2_forward.1} parent=1 // pred_check_branch
      %37 = sbr.rel (0) target = $region13
    $region12: #{rc_sense_model2_forward.1} parent=1 // pred_region
      %s39 = ssub.s32 256, 256
      %40 = vsyncadd [#allocation7], %s39
      %s41 = sshll.u32 [#allocation6], 4
      %s42 = int_to_ptr.vmem [resolvable:$true] %s41
      %47 = dma.hbm_to_vmem [thread:$0]  %s2, 256, %s42, [#allocation7], 128, 128, 8
    $region13: #{rc_sense_model2_forward.1} parent=1 // pred_fallthru
      _
    // Predicated region
    $region14: #{rc_sense_model2_forward.1} parent=1 // pred_check
      _
    $region15: #{rc_sense_model2_forward.1} parent=1 // pred_check_branch
      %49 = sbr.rel (0) target = $region17
    $region16: #{rc_sense_model2_forward.1} parent=1 // pred_region
      _
    $region17: #{rc_sense_model2_forward.1} parent=1 // pred_fallthru
      _
    // Predicated region
    $region18: #{rc_sense_model2_forward.1} parent=1 // pred_check
      _
    $region19: #{rc_sense_model2_forward.1} parent=1 // pred_check_branch
      %51 = sbr.rel (0) target = $region21
    $region20: #{rc_sense_model2_forward.1} parent=1 // pred_region
      _
    $region21: #{rc_sense_model2_forward.1} parent=1 // pred_fallthru
      _
    // Predicated region
    $region22: #{rc_sense_model2_forward.1} parent=1 // pred_check
      _
    $region23: #{rc_sense_model2_forward.1} parent=1 // pred_check_branch
      %53 = sbr.rel (0) target = $region25
    $region24: #{rc_sense_model2_forward.1} parent=1 // pred_region
      %s55 = ssub.s32 512, 512
      %56 = vsyncadd [#allocation7], %s55
      %s57 = sshll.u32 [#allocation8], 4
      %s58 = int_to_ptr.vmem [resolvable:$true] %s57
      %63 = dma.hbm_to_vmem [thread:$0]  %s5, 512, %s58, [#allocation7], 128, 128, 8
    $region25: #{rc_sense_model2_forward.1} parent=1 // pred_fallthru
      _
    // Predicated region
    $region26: #{rc_sense_model2_forward.1} parent=1 // pred_check
      _
    $region27: #{rc_sense_model2_forward.1} parent=1 // pred_check_branch
      %65 = sbr.rel (0) target = $region29
    $region28: #{rc_sense_model2_forward.1} parent=1 // pred_region
      %s67 = ssub.s32 512, 512
      %68 = vsyncadd [#allocation10], %s67
      %s69 = sshll.u32 [#allocation9], 4
      %s70 = int_to_ptr.vmem [resolvable:$true] %s69
      %75 = dma.hbm_to_vmem [thread:$0]  %s6, 512, %s70, [#allocation10], 128, 128, 8
    $region29: #{rc_sense_model2_forward.1} parent=1 // pred_fallthru
      _
    // Predicated region
    $region30: #{rc_sense_model2_forward.1} parent=1 // pred_check
      _
    $region31: #{rc_sense_model2_forward.1} parent=1 // pred_check_branch
      %77 = sbr.rel (0) target = $region33
    $region32: #{rc_sense_model2_forward.1} parent=1 // pred_region
      _
    $region33: #{rc_sense_model2_forward.1} parent=1 // pred_fallthru
      _
    // Predicated region
    $region34: #{rc_sense_model2_forward.1} parent=1 // pred_check
      _
    $region35: #{rc_sense_model2_forward.1} parent=1 // pred_check_branch
      %79 = sbr.rel (0) target = $region37
    $region36: #{rc_sense_model2_forward.1} parent=1 // pred_region
      _
    $region37: #{rc_sense_model2_forward.1} parent=1 // pred_fallthru
      _
    // Predicated region
    $region38: #{rc_sense_model2_forward.1} parent=1 // pred_check
      _
    $region39: #{rc_sense_model2_forward.1} parent=1 // pred_check_branch
      %81 = sbr.rel (0) target = $region41
    $region40: #{rc_sense_model2_forward.1} parent=1 // pred_region
      %s83 = ssub.s32 16, 16
      %84 = vsyncadd [#allocation10], %s83
      %s86 = sshll.u32 [#allocation11], 4
      %s87 = int_to_ptr.vmem [resolvable:$true] %s86
      %89 = dma.hbm_to_vmem [thread:$0]  %s9, 16, %s87, [#allocation10]
    $region41: #{rc_sense_model2_forward.1} parent=1 // pred_fallthru
      _
    // Predicated region
    $region42: #{rc_sense_model2_forward.1} parent=1 // pred_check
      _
    $region43: #{rc_sense_model2_forward.1} parent=1 // pred_check_branch
      %91 = sbr.rel (0) target = $region45
    $region44: #{rc_sense_model2_forward.1} parent=1 // pred_region
      %92 = dma.done [#allocation4], 64
    $region45: #{rc_sense_model2_forward.1} parent=1 // pred_fallthru
      _
    // Predicated region
    $region46: #{rc_sense_model2_forward.1} parent=1 // pred_check
      _
    $region47: #{rc_sense_model2_forward.1} parent=1 // pred_check_branch
      %94 = sbr.rel (0) target = $region49
    $region48: #{rc_sense_model2_forward.1} parent=1 // pred_region
      %95 = dma.done [#allocation7], 256
    $region49: #{rc_sense_model2_forward.1} parent=1 // pred_fallthru
      _
    // Predicated region
    $region50: #{rc_sense_model2_forward.1} parent=1 // pred_check
      _
    $region51: #{rc_sense_model2_forward.1} parent=1 // pred_check_branch
      %97 = sbr.rel (0) target = $region53
    $region52: #{rc_sense_model2_forward.1} parent=1 // pred_region
      %98 = dma.done [#allocation7], 512
    $region53: #{rc_sense_model2_forward.1} parent=1 // pred_fallthru
      _
    // Predicated region
    $region54: #{rc_sense_model2_forward.1} parent=1 // pred_check
      _
    $region55: #{rc_sense_model2_forward.1} parent=1 // pred_check_branch
      %100 = sbr.rel (0) target = $region57
    $region56: #{rc_sense_model2_forward.1} parent=1 // pred_region
      %101 = dma.done [#allocation10], 512
    $region57: #{rc_sense_model2_forward.1} parent=1 // pred_fallthru
      _
    // Predicated region
    $region58: #{rc_sense_model2_forward.1} parent=1 // pred_check
      _
    $region59: #{rc_sense_model2_forward.1} parent=1 // pred_check_branch
      %103 = sbr.rel (0) target = $region61
    $region60: #{rc_sense_model2_forward.1} parent=1 // pred_region
      %104 = dma.done [#allocation10], 16
    $region61: #{rc_sense_model2_forward.1} parent=1 // pred_fallthru
      _
    %v105 = vld [vmem:[#allocation6] sm:$0xff]
    %v106 = vld [vmem:[#allocation6 + $0x8] sm:$0xff]
    %v107 = vld [vmem:[#allocation8] sm:$0xff]
    %v108 = vld [vmem:[#allocation8 + $0x8] sm:$0xff]
    %v109 = vld [vmem:[#allocation8 + $0x10] sm:$0xff]
    %v110 = vld [vmem:[#allocation8 + $0x18] sm:$0xff]
    %v111 = vld [vmem:[%s3] sm:$0xff]
    %v112 = vld [vmem:[%s3 + $0x8] sm:$0xff]
    %v113 = vld [vmem:[%s3 + $0x10] sm:$0xff]
    %v114 = vld [vmem:[%s3 + $0x18] sm:$0xff]
    %v115 = vld [vmem:[#allocation9] sm:$0xff]
    %v116 = vld [vmem:[#allocation9 + $0x8] sm:$0xff]
    %v117 = vld [vmem:[#allocation9 + $0x10] sm:$0xff]
    %v118 = vld [vmem:[#allocation9 + $0x18] sm:$0xff]
    %v119 = vld [vmem:[%s4] sm:$0x1]
    %v120 = vld [vmem:[%s7] sm:$0x1]
    %v122 = vlaneseq
    %v123 = vshrl.u32 %v122, 7
    %v124 = vsub.s32 0, %v123
    %v125 = vrot.slane %v120, %v124
    %v127 = vld [vmem:[%s0] sm:$0xff]
    %v128 = vld [vmem:[%s0 + $0x8] sm:$0xff]
    %v131 = vrot.slane %v128, 7
    %vm132 = vcmask 1041409
    %v133 = vsel %vm132, %v131, %v127
    %v135 = vrot.slane %v127, 7
    %v136 = vrot.slane %v128, 6
    %vm137 = vcmask 1043459
    %v138 = vsel %vm137, %v136, %v135
    %v140 = vrot.slane %v127, 6
    %v141 = vrot.slane %v128, 5
    %vm142 = vcmask 1045509
    %v143 = vsel %vm142, %v141, %v140
    %v145 = vrot.slane %v127, 5
    %v146 = vrot.slane %v128, 4
    %vm147 = vcmask 1047559
    %v148 = vsel %vm147, %v146, %v145
    %v150 = vrot.slane %v127, 4
    %v151 = vrot.slane %v128, 3
    %v152 = vsel %vm132, %v151, %v150
    %v154 = vrot.slane %v127, 3
    %v155 = vrot.slane %v128, 2
    %v156 = vsel %vm137, %v155, %v154
    %v158 = vrot.slane %v127, 2
    %v159 = vrot.slane %v128, 1
    %v160 = vsel %vm142, %v159, %v158
    %v162 = vrot.slane %v127, 1
    %v163 = vsel %vm147, %v128, %v162
    %vm165 = vcmask 1041408
    %v166 = vsel %vm165, %v133, %v138
    %vm167 = vcmask 1043456
    %v168 = vsel %vm167, %v166, %v143
    %vm169 = vcmask 1045504
    %v170 = vsel %vm169, %v168, %v148
    %v171 = vsel %vm165, %v152, %v156
    %v172 = vsel %vm167, %v171, %v160
    %v173 = vsel %vm169, %v172, %v163
    %v175 = vlaneseq
    %v176 = vshrl.u32 %v175, 7
    %v177 = vsub.s32 0, %v176
    %v178 = vrot.slane %v119, %v177
    %vm180 = vcmask 130048
    %v182 = vsel %vm180, %v170, 0
    %v185 = vsel %vm180, %v173, 0
    %187 = vmatprep.subr.mxu0 0.0
    %188 = vmatpush1.msra.mxu0 0.0
    %189 = vmatprep.subr.mxu0 0.0
    %190 = vmatpush1.msra.mxu0 0.0
    %191 = vmatprep.subr.mxu0 0.0
    %192 = vmatpush1.msra.mxu0 0.0
    %193 = vmatprep.subr.mxu0 0.0
    %194 = vmatpush1.msra.mxu0 0.0
    %195 = vmatprep.subr.mxu0 0.0
    %196 = vmatpush1.msra.mxu0 0.0
    %197 = vmatprep.subr.mxu0 0.0
    %198 = vmatpush1.msra.mxu0 0.0
    %199 = vmatprep.subr.mxu0 0.0
    %200 = vmatpush1.msra.mxu0 0.0
    %201 = vmatprep.subr.mxu0 0.0
    %202 = vmatpush1.msra.mxu0 0.0
    %203 = vmatprep.subr.mxu0 0.0
    %204 = vmatpush1.msra.mxu0 0.0
    %205 = vmatprep.subr.mxu0 0.0
    %206 = vmatpush1.msra.mxu0 0.0
    %207 = vmatprep.subr.mxu0 0.0
    %208 = vmatpush1.msra.mxu0 0.0
    %209 = vmatprep.subr.mxu0 0.0
    %210 = vmatpush1.msra.mxu0 0.0
    %211 = vmatprep.subr.mxu0 0.0
    %212 = vmatpush1.msra.mxu0 0.0
    %213 = vmatprep.subr.mxu0 0.0
    %214 = vmatpush1.msra.mxu0 0.0
    %215 = vmatprep.subr.mxu0 0.0
    %216 = vmatpush1.msra.mxu0 %v106
    %217 = vmatprep.subr.mxu0 0.0
    %218 = vmatpush1.msra.mxu0 %v105
    %219 = vmatprep.subr.mxu0 0.0
    %220 = vmatpush2.msra.mxu0 0.0
    %221 = vmatprep.subr.mxu0 0.0
    %222 = vmatpush2.msra.mxu0 0.0
    %223 = vmatprep.subr.mxu0 0.0
    %224 = vmatpush2.msra.mxu0 0.0
    %225 = vmatprep.subr.mxu0 0.0
    %226 = vmatpush2.msra.mxu0 0.0
    %227 = vmatprep.subr.mxu0 0.0
    %228 = vmatpush2.msra.mxu0 0.0
    %229 = vmatprep.subr.mxu0 0.0
    %230 = vmatpush2.msra.mxu0 0.0
    %231 = vmatprep.subr.mxu0 0.0
    %232 = vmatpush2.msra.mxu0 0.0
    %233 = vmatprep.subr.mxu0 0.0
    %234 = vmatpush2.msra.mxu0 0.0
    %235 = vmatprep.subr.mxu0 0.0
    %236 = vmatpush2.msra.mxu0 0.0
    %237 = vmatprep.subr.mxu0 0.0
    %238 = vmatpush2.msra.mxu0 0.0
    %239 = vmatprep.subr.mxu0 0.0
    %240 = vmatpush2.msra.mxu0 0.0
    %241 = vmatprep.subr.mxu0 0.0
    %242 = vmatpush2.msra.mxu0 0.0
    %243 = vmatprep.subr.mxu0 0.0
    %244 = vmatpush2.msra.mxu0 0.0
    %245 = vmatprep.subr.mxu0 0.0
    %246 = vmatpush2.msra.mxu0 0.0
    %247 = vmatprep.subr.mxu0 0.0
    %248 = vmatpush2.msra.mxu0 0.0
    %249 = vmatprep.subr.mxu0 0.0
    %250 = vmatpush2.msra.mxu0 0.0
    %251 = vmatprep.mubr.f32.mxu0 0.0
    %252 = vmatmul.mubr.f32.gmra.mxu0 %v182
    %v253 = vpop.f32.mrf.mxu0
    %v254 = vadd.f32 %v178, %v253
    %v255 = vpop.f32.mrf.mxu0
    %256 = vmatprep.mubr.f32.mxu0 0.0
    %257 = vmatmul.mubr.f32.gmra.mxu0 %v185
    %v258 = vpop.f32.mrf.mxu0
    %v259 = vadd.f32 %v178, %v258
    %v260 = vpop.f32.mrf.mxu0
    %261 = vdwg.mxu0
    %v262 = vld [vmem:[#allocation3] sm:$0x3]
    %s263 = scalar_lea.vmem [#allocation3], 2
    %v264 = vld [vmem:[%s263] sm:$0x3]
    %vm265 = vcmask 261120
    %v267 = vsel %vm265, %v262, 0
    %269 = vmatprep.subr.mxu0 0.0
    %270 = vmatpush1.msra.mxu0 0.0
    %271 = vmatprep.subr.mxu0 0.0
    %272 = vmatpush1.msra.mxu0 0.0
    %273 = vmatprep.subr.mxu0 0.0
    %274 = vmatpush1.msra.mxu0 0.0
    %275 = vmatprep.subr.mxu0 0.0
    %276 = vmatpush1.msra.mxu0 0.0
    %277 = vmatprep.subr.mxu0 0.0
    %278 = vmatpush1.msra.mxu0 0.0
    %279 = vmatprep.subr.mxu0 0.0
    %280 = vmatpush1.msra.mxu0 0.0
    %281 = vmatprep.subr.mxu0 0.0
    %282 = vmatpush1.msra.mxu0 0.0
    %283 = vmatprep.subr.mxu0 0.0
    %284 = vmatpush1.msra.mxu0 0.0
    %285 = vmatprep.subr.mxu0 0.0
    %286 = vmatpush1.msra.mxu0 0.0
    %287 = vmatprep.subr.mxu0 0.0
    %288 = vmatpush1.msra.mxu0 0.0
    %289 = vmatprep.subr.mxu0 0.0
    %290 = vmatpush1.msra.mxu0 0.0
    %291 = vmatprep.subr.mxu0 0.0
    %292 = vmatpush1.msra.mxu0 0.0
    %293 = vmatprep.subr.mxu0 0.0
    %294 = vmatpush1.msra.mxu0 %v114
    %295 = vmatprep.subr.mxu0 0.0
    %296 = vmatpush1.msra.mxu0 %v113
    %297 = vmatprep.subr.mxu0 0.0
    %298 = vmatpush1.msra.mxu0 %v112
    %299 = vmatprep.subr.mxu0 0.0
    %300 = vmatpush1.msra.mxu0 %v111
    %301 = vmatprep.subr.mxu0 0.0
    %302 = vmatpush2.msra.mxu0 0.0
    %303 = vmatprep.subr.mxu0 0.0
    %304 = vmatpush2.msra.mxu0 0.0
    %305 = vmatprep.subr.mxu0 0.0
    %306 = vmatpush2.msra.mxu0 0.0
    %307 = vmatprep.subr.mxu0 0.0
    %308 = vmatpush2.msra.mxu0 0.0
    %309 = vmatprep.subr.mxu0 0.0
    %310 = vmatpush2.msra.mxu0 0.0
    %311 = vmatprep.subr.mxu0 0.0
    %312 = vmatpush2.msra.mxu0 0.0
    %313 = vmatprep.subr.mxu0 0.0
    %314 = vmatpush2.msra.mxu0 0.0
    %315 = vmatprep.subr.mxu0 0.0
    %316 = vmatpush2.msra.mxu0 0.0
    %317 = vmatprep.subr.mxu0 0.0
    %318 = vmatpush2.msra.mxu0 0.0
    %319 = vmatprep.subr.mxu0 0.0
    %320 = vmatpush2.msra.mxu0 0.0
    %321 = vmatprep.subr.mxu0 0.0
    %322 = vmatpush2.msra.mxu0 0.0
    %323 = vmatprep.subr.mxu0 0.0
    %324 = vmatpush2.msra.mxu0 0.0
    %325 = vmatprep.subr.mxu0 0.0
    %326 = vmatpush2.msra.mxu0 0.0
    %327 = vmatprep.subr.mxu0 0.0
    %328 = vmatpush2.msra.mxu0 0.0
    %329 = vmatprep.subr.mxu0 0.0
    %330 = vmatpush2.msra.mxu0 0.0
    %331 = vmatprep.subr.mxu0 0.0
    %332 = vmatpush2.msra.mxu0 0.0
    %333 = vmatprep.mubr.f32.mxu0 0.0
    %334 = vmatmul.mubr.f32.gmra.mxu0 %v267
    %v335 = vpop.f32.mrf.mxu0
    %v336 = vadd.f32 0.0, %v335
    %v337 = vpop.f32.mrf.mxu0
    %338 = vdwg.mxu0
    %v339 = vadd.f32 %v254, %v336
    %v340 = vtanh.pop %v339
    %v342 = vsel %vm265, %v340, 0
    %344 = vmatprep.subr.mxu0 0.0
    %345 = vmatpush1.msra.mxu0 0.0
    %346 = vmatprep.subr.mxu0 0.0
    %347 = vmatpush1.msra.mxu0 0.0
    %348 = vmatprep.subr.mxu0 0.0
    %349 = vmatpush1.msra.mxu0 0.0
    %350 = vmatprep.subr.mxu0 0.0
    %351 = vmatpush1.msra.mxu0 0.0
    %352 = vmatprep.subr.mxu0 0.0
    %353 = vmatpush1.msra.mxu0 0.0
    %354 = vmatprep.subr.mxu0 0.0
    %355 = vmatpush1.msra.mxu0 0.0
    %356 = vmatprep.subr.mxu0 0.0
    %357 = vmatpush1.msra.mxu0 0.0
    %358 = vmatprep.subr.mxu0 0.0
    %359 = vmatpush1.msra.mxu0 0.0
    %360 = vmatprep.subr.mxu0 0.0
    %361 = vmatpush1.msra.mxu0 0.0
    %362 = vmatprep.subr.mxu0 0.0
    %363 = vmatpush1.msra.mxu0 0.0
    %364 = vmatprep.subr.mxu0 0.0
    %365 = vmatpush1.msra.mxu0 0.0
    %366 = vmatprep.subr.mxu0 0.0
    %367 = vmatpush1.msra.mxu0 0.0
    %368 = vmatprep.subr.mxu0 0.0
    %369 = vmatpush1.msra.mxu0 %v114
    %370 = vmatprep.subr.mxu0 0.0
    %371 = vmatpush1.msra.mxu0 %v113
    %372 = vmatprep.subr.mxu0 0.0
    %373 = vmatpush1.msra.mxu0 %v112
    %374 = vmatprep.subr.mxu0 0.0
    %375 = vmatpush1.msra.mxu0 %v111
    %376 = vmatprep.subr.mxu0 0.0
    %377 = vmatpush2.msra.mxu0 0.0
    %378 = vmatprep.subr.mxu0 0.0
    %379 = vmatpush2.msra.mxu0 0.0
    %380 = vmatprep.subr.mxu0 0.0
    %381 = vmatpush2.msra.mxu0 0.0
    %382 = vmatprep.subr.mxu0 0.0
    %383 = vmatpush2.msra.mxu0 0.0
    %384 = vmatprep.subr.mxu0 0.0
    %385 = vmatpush2.msra.mxu0 0.0
    %386 = vmatprep.subr.mxu0 0.0
    %387 = vmatpush2.msra.mxu0 0.0
    %388 = vmatprep.subr.mxu0 0.0
    %389 = vmatpush2.msra.mxu0 0.0
    %390 = vmatprep.subr.mxu0 0.0
    %391 = vmatpush2.msra.mxu0 0.0
    %392 = vmatprep.subr.mxu0 0.0
    %393 = vmatpush2.msra.mxu0 0.0
    %394 = vmatprep.subr.mxu0 0.0
    %395 = vmatpush2.msra.mxu0 0.0
    %396 = vmatprep.subr.mxu0 0.0
    %397 = vmatpush2.msra.mxu0 0.0
    %398 = vmatprep.subr.mxu0 0.0
    %399 = vmatpush2.msra.mxu0 0.0
    %400 = vmatprep.subr.mxu0 0.0
    %401 = vmatpush2.msra.mxu0 0.0
    %402 = vmatprep.subr.mxu0 0.0
    %403 = vmatpush2.msra.mxu0 0.0
    %404 = vmatprep.subr.mxu0 0.0
    %405 = vmatpush2.msra.mxu0 0.0
    %406 = vmatprep.subr.mxu0 0.0
    %407 = vmatpush2.msra.mxu0 0.0
    %408 = vmatprep.mubr.f32.mxu0 0.0
    %409 = vmatmul.mubr.f32.gmra.mxu0 %v342
    %v410 = vpop.f32.mrf.mxu0
    %v411 = vadd.f32 0.0, %v410
    %v412 = vpop.f32.mrf.mxu0
    %413 = vdwg.mxu0
    %v415 = vrot.slane %v411, 6
    %v417 = vadd.f32 %v254, %v415
    %v418 = vtanh.pop %v417
    %419 = vmatprep.subr.mxu0 0.0
    %420 = vmatpush1.msra.mxu0 0.0
    %421 = vmatprep.subr.mxu0 0.0
    %422 = vmatpush1.msra.mxu0 0.0
    %423 = vmatprep.subr.mxu0 0.0
    %424 = vmatpush1.msra.mxu0 0.0
    %425 = vmatprep.subr.mxu0 0.0
    %426 = vmatpush1.msra.mxu0 0.0
    %427 = vmatprep.subr.mxu0 0.0
    %428 = vmatpush1.msra.mxu0 0.0
    %429 = vmatprep.subr.mxu0 0.0
    %430 = vmatpush1.msra.mxu0 0.0
    %431 = vmatprep.subr.mxu0 0.0
    %432 = vmatpush1.msra.mxu0 0.0
    %433 = vmatprep.subr.mxu0 0.0
    %434 = vmatpush1.msra.mxu0 0.0
    %435 = vmatprep.subr.mxu0 0.0
    %436 = vmatpush1.msra.mxu0 0.0
    %437 = vmatprep.subr.mxu0 0.0
    %438 = vmatpush1.msra.mxu0 0.0
    %439 = vmatprep.subr.mxu0 0.0
    %440 = vmatpush1.msra.mxu0 0.0
    %441 = vmatprep.subr.mxu0 0.0
    %442 = vmatpush1.msra.mxu0 0.0
    %443 = vmatprep.subr.mxu0 0.0
    %444 = vmatpush1.msra.mxu0 %v110
    %445 = vmatprep.subr.mxu0 0.0
    %446 = vmatpush1.msra.mxu0 %v109
    %447 = vmatprep.subr.mxu0 0.0
    %448 = vmatpush1.msra.mxu0 %v108
    %449 = vmatprep.subr.mxu0 0.0
    %450 = vmatpush1.msra.mxu0 %v107
    %451 = vmatprep.subr.mxu0 0.0
    %452 = vmatpush2.msra.mxu0 0.0
    %453 = vmatprep.subr.mxu0 0.0
    %454 = vmatpush2.msra.mxu0 0.0
    %455 = vmatprep.subr.mxu0 0.0
    %456 = vmatpush2.msra.mxu0 0.0
    %457 = vmatprep.subr.mxu0 0.0
    %458 = vmatpush2.msra.mxu0 0.0
    %459 = vmatprep.subr.mxu0 0.0
    %460 = vmatpush2.msra.mxu0 0.0
    %461 = vmatprep.subr.mxu0 0.0
    %462 = vmatpush2.msra.mxu0 0.0
    %463 = vmatprep.subr.mxu0 0.0
    %464 = vmatpush2.msra.mxu0 0.0
    %465 = vmatprep.subr.mxu0 0.0
    %466 = vmatpush2.msra.mxu0 0.0
    %467 = vmatprep.subr.mxu0 0.0
    %468 = vmatpush2.msra.mxu0 0.0
    %469 = vmatprep.subr.mxu0 0.0
    %470 = vmatpush2.msra.mxu0 0.0
    %471 = vmatprep.subr.mxu0 0.0
    %472 = vmatpush2.msra.mxu0 0.0
    %473 = vmatprep.subr.mxu0 0.0
    %474 = vmatpush2.msra.mxu0 0.0
    %475 = vmatprep.subr.mxu0 0.0
    %476 = vmatpush2.msra.mxu0 0.0
    %477 = vmatprep.subr.mxu0 0.0
    %478 = vmatpush2.msra.mxu0 0.0
    %479 = vmatprep.subr.mxu0 0.0
    %480 = vmatpush2.msra.mxu0 0.0
    %481 = vmatprep.subr.mxu0 0.0
    %482 = vmatpush2.msra.mxu0 0.0
    %483 = vmatprep.mubr.f32.mxu0 0.0
    %484 = vmatmul.mubr.f32.gmra.mxu0 %v342
    %v485 = vpop.f32.mrf.mxu0
    %v486 = vadd.f32 %v125, %v485
    %v487 = vpop.f32.mrf.mxu0
    %488 = vdwg.mxu0
    %v490 = vsel %vm265, %v264, 0
    %492 = vmatprep.subr.mxu0 0.0
    %493 = vmatpush1.msra.mxu0 0.0
    %494 = vmatprep.subr.mxu0 0.0
    %495 = vmatpush1.msra.mxu0 0.0
    %496 = vmatprep.subr.mxu0 0.0
    %497 = vmatpush1.msra.mxu0 0.0
    %498 = vmatprep.subr.mxu0 0.0
    %499 = vmatpush1.msra.mxu0 0.0
    %500 = vmatprep.subr.mxu0 0.0
    %501 = vmatpush1.msra.mxu0 0.0
    %502 = vmatprep.subr.mxu0 0.0
    %503 = vmatpush1.msra.mxu0 0.0
    %504 = vmatprep.subr.mxu0 0.0
    %505 = vmatpush1.msra.mxu0 0.0
    %506 = vmatprep.subr.mxu0 0.0
    %507 = vmatpush1.msra.mxu0 0.0
    %508 = vmatprep.subr.mxu0 0.0
    %509 = vmatpush1.msra.mxu0 0.0
    %510 = vmatprep.subr.mxu0 0.0
    %511 = vmatpush1.msra.mxu0 0.0
    %512 = vmatprep.subr.mxu0 0.0
    %513 = vmatpush1.msra.mxu0 0.0
    %514 = vmatprep.subr.mxu0 0.0
    %515 = vmatpush1.msra.mxu0 0.0
    %516 = vmatprep.subr.mxu0 0.0
    %517 = vmatpush1.msra.mxu0 %v118
    %518 = vmatprep.subr.mxu0 0.0
    %519 = vmatpush1.msra.mxu0 %v117
    %520 = vmatprep.subr.mxu0 0.0
    %521 = vmatpush1.msra.mxu0 %v116
    %522 = vmatprep.subr.mxu0 0.0
    %523 = vmatpush1.msra.mxu0 %v115
    %524 = vmatprep.subr.mxu0 0.0
    %525 = vmatpush2.msra.mxu0 0.0
    %526 = vmatprep.subr.mxu0 0.0
    %527 = vmatpush2.msra.mxu0 0.0
    %528 = vmatprep.subr.mxu0 0.0
    %529 = vmatpush2.msra.mxu0 0.0
    %530 = vmatprep.subr.mxu0 0.0
    %531 = vmatpush2.msra.mxu0 0.0
    %532 = vmatprep.subr.mxu0 0.0
    %533 = vmatpush2.msra.mxu0 0.0
    %534 = vmatprep.subr.mxu0 0.0
    %535 = vmatpush2.msra.mxu0 0.0
    %536 = vmatprep.subr.mxu0 0.0
    %537 = vmatpush2.msra.mxu0 0.0
    %538 = vmatprep.subr.mxu0 0.0
    %539 = vmatpush2.msra.mxu0 0.0
    %540 = vmatprep.subr.mxu0 0.0
    %541 = vmatpush2.msra.mxu0 0.0
    %542 = vmatprep.subr.mxu0 0.0
    %543 = vmatpush2.msra.mxu0 0.0
    %544 = vmatprep.subr.mxu0 0.0
    %545 = vmatpush2.msra.mxu0 0.0
    %546 = vmatprep.subr.mxu0 0.0
    %547 = vmatpush2.msra.mxu0 0.0
    %548 = vmatprep.subr.mxu0 0.0
    %549 = vmatpush2.msra.mxu0 0.0
    %550 = vmatprep.subr.mxu0 0.0
    %551 = vmatpush2.msra.mxu0 0.0
    %552 = vmatprep.subr.mxu0 0.0
    %553 = vmatpush2.msra.mxu0 0.0
    %554 = vmatprep.subr.mxu0 0.0
    %555 = vmatpush2.msra.mxu0 0.0
    %556 = vmatprep.mubr.f32.mxu0 0.0
    %557 = vmatmul.mubr.f32.gmra.mxu0 %v490
    %v558 = vpop.f32.mrf.mxu0
    %v559 = vadd.f32 0.0, %v558
    %v560 = vpop.f32.mrf.mxu0
    %561 = vdwg.mxu0
    %v562 = vadd.f32 %v486, %v559
    %v563 = vtanh.pop %v562
    %vm564 = vcmask 254976
    %565 = vst.msk [vmem:[#allocation2] sm:$0x3] %vm564, %v563
    %v567 = vrot.slane %v418, 2
    %v568 = vsel %vm265, %v567, 0
    %570 = vmatprep.subr.mxu0 0.0
    %571 = vmatpush1.msra.mxu0 0.0
    %572 = vmatprep.subr.mxu0 0.0
    %573 = vmatpush1.msra.mxu0 0.0
    %574 = vmatprep.subr.mxu0 0.0
    %575 = vmatpush1.msra.mxu0 0.0
    %576 = vmatprep.subr.mxu0 0.0
    %577 = vmatpush1.msra.mxu0 0.0
    %578 = vmatprep.subr.mxu0 0.0
    %579 = vmatpush1.msra.mxu0 0.0
    %580 = vmatprep.subr.mxu0 0.0
    %581 = vmatpush1.msra.mxu0 0.0
    %582 = vmatprep.subr.mxu0 0.0
    %583 = vmatpush1.msra.mxu0 0.0
    %584 = vmatprep.subr.mxu0 0.0
    %585 = vmatpush1.msra.mxu0 0.0
    %586 = vmatprep.subr.mxu0 0.0
    %587 = vmatpush1.msra.mxu0 0.0
    %588 = vmatprep.subr.mxu0 0.0
    %589 = vmatpush1.msra.mxu0 0.0
    %590 = vmatprep.subr.mxu0 0.0
    %591 = vmatpush1.msra.mxu0 0.0
    %592 = vmatprep.subr.mxu0 0.0
    %593 = vmatpush1.msra.mxu0 0.0
    %594 = vmatprep.subr.mxu0 0.0
    %595 = vmatpush1.msra.mxu0 %v114
    %596 = vmatprep.subr.mxu0 0.0
    %597 = vmatpush1.msra.mxu0 %v113
    %598 = vmatprep.subr.mxu0 0.0
    %599 = vmatpush1.msra.mxu0 %v112
    %600 = vmatprep.subr.mxu0 0.0
    %601 = vmatpush1.msra.mxu0 %v111
    %602 = vmatprep.subr.mxu0 0.0
    %603 = vmatpush2.msra.mxu0 0.0
    %604 = vmatprep.subr.mxu0 0.0
    %605 = vmatpush2.msra.mxu0 0.0
    %606 = vmatprep.subr.mxu0 0.0
    %607 = vmatpush2.msra.mxu0 0.0
    %608 = vmatprep.subr.mxu0 0.0
    %609 = vmatpush2.msra.mxu0 0.0
    %610 = vmatprep.subr.mxu0 0.0
    %611 = vmatpush2.msra.mxu0 0.0
    %612 = vmatprep.subr.mxu0 0.0
    %613 = vmatpush2.msra.mxu0 0.0
    %614 = vmatprep.subr.mxu0 0.0
    %615 = vmatpush2.msra.mxu0 0.0
    %616 = vmatprep.subr.mxu0 0.0
    %617 = vmatpush2.msra.mxu0 0.0
    %618 = vmatprep.subr.mxu0 0.0
    %619 = vmatpush2.msra.mxu0 0.0
    %620 = vmatprep.subr.mxu0 0.0
    %621 = vmatpush2.msra.mxu0 0.0
    %622 = vmatprep.subr.mxu0 0.0
    %623 = vmatpush2.msra.mxu0 0.0
    %624 = vmatprep.subr.mxu0 0.0
    %625 = vmatpush2.msra.mxu0 0.0
    %626 = vmatprep.subr.mxu0 0.0
    %627 = vmatpush2.msra.mxu0 0.0
    %628 = vmatprep.subr.mxu0 0.0
    %629 = vmatpush2.msra.mxu0 0.0
    %630 = vmatprep.subr.mxu0 0.0
    %631 = vmatpush2.msra.mxu0 0.0
    %632 = vmatprep.subr.mxu0 0.0
    %633 = vmatpush2.msra.mxu0 0.0
    %634 = vmatprep.mubr.f32.mxu0 0.0
    %635 = vmatmul.mubr.f32.gmra.mxu0 %v568
    %v636 = vpop.f32.mrf.mxu0
    %v637 = vadd.f32 0.0, %v636
    %v638 = vpop.f32.mrf.mxu0
    %639 = vdwg.mxu0
    %v641 = vrot.slane %v637, 4
    %v643 = vadd.f32 %v254, %v641
    %v644 = vtanh.pop %v643
    %645 = vmatprep.subr.mxu0 0.0
    %646 = vmatpush1.msra.mxu0 0.0
    %647 = vmatprep.subr.mxu0 0.0
    %648 = vmatpush1.msra.mxu0 0.0
    %649 = vmatprep.subr.mxu0 0.0
    %650 = vmatpush1.msra.mxu0 0.0
    %651 = vmatprep.subr.mxu0 0.0
    %652 = vmatpush1.msra.mxu0 0.0
    %653 = vmatprep.subr.mxu0 0.0
    %654 = vmatpush1.msra.mxu0 0.0
    %655 = vmatprep.subr.mxu0 0.0
    %656 = vmatpush1.msra.mxu0 0.0
    %657 = vmatprep.subr.mxu0 0.0
    %658 = vmatpush1.msra.mxu0 0.0
    %659 = vmatprep.subr.mxu0 0.0
    %660 = vmatpush1.msra.mxu0 0.0
    %661 = vmatprep.subr.mxu0 0.0
    %662 = vmatpush1.msra.mxu0 0.0
    %663 = vmatprep.subr.mxu0 0.0
    %664 = vmatpush1.msra.mxu0 0.0
    %665 = vmatprep.subr.mxu0 0.0
    %666 = vmatpush1.msra.mxu0 0.0
    %667 = vmatprep.subr.mxu0 0.0
    %668 = vmatpush1.msra.mxu0 0.0
    %669 = vmatprep.subr.mxu0 0.0
    %670 = vmatpush1.msra.mxu0 %v110
    %671 = vmatprep.subr.mxu0 0.0
    %672 = vmatpush1.msra.mxu0 %v109
    %673 = vmatprep.subr.mxu0 0.0
    %674 = vmatpush1.msra.mxu0 %v108
    %675 = vmatprep.subr.mxu0 0.0
    %676 = vmatpush1.msra.mxu0 %v107
    %677 = vmatprep.subr.mxu0 0.0
    %678 = vmatpush2.msra.mxu0 0.0
    %679 = vmatprep.subr.mxu0 0.0
    %680 = vmatpush2.msra.mxu0 0.0
    %681 = vmatprep.subr.mxu0 0.0
    %682 = vmatpush2.msra.mxu0 0.0
    %683 = vmatprep.subr.mxu0 0.0
    %684 = vmatpush2.msra.mxu0 0.0
    %685 = vmatprep.subr.mxu0 0.0
    %686 = vmatpush2.msra.mxu0 0.0
    %687 = vmatprep.subr.mxu0 0.0
    %688 = vmatpush2.msra.mxu0 0.0
    %689 = vmatprep.subr.mxu0 0.0
    %690 = vmatpush2.msra.mxu0 0.0
    %691 = vmatprep.subr.mxu0 0.0
    %692 = vmatpush2.msra.mxu0 0.0
    %693 = vmatprep.subr.mxu0 0.0
    %694 = vmatpush2.msra.mxu0 0.0
    %695 = vmatprep.subr.mxu0 0.0
    %696 = vmatpush2.msra.mxu0 0.0
    %697 = vmatprep.subr.mxu0 0.0
    %698 = vmatpush2.msra.mxu0 0.0
    %699 = vmatprep.subr.mxu0 0.0
    %700 = vmatpush2.msra.mxu0 0.0
    %701 = vmatprep.subr.mxu0 0.0
    %702 = vmatpush2.msra.mxu0 0.0
    %703 = vmatprep.subr.mxu0 0.0
    %704 = vmatpush2.msra.mxu0 0.0
    %705 = vmatprep.subr.mxu0 0.0
    %706 = vmatpush2.msra.mxu0 0.0
    %707 = vmatprep.subr.mxu0 0.0
    %708 = vmatpush2.msra.mxu0 0.0
    %709 = vmatprep.mubr.f32.mxu0 0.0
    %710 = vmatmul.mubr.f32.gmra.mxu0 %v568
    %v711 = vpop.f32.mrf.mxu0
    %v712 = vadd.f32 %v125, %v711
    %v713 = vpop.f32.mrf.mxu0
    %714 = vdwg.mxu0
    %v716 = vsel %vm265, %v563, 0
    %718 = vmatprep.subr.mxu0 0.0
    %719 = vmatpush1.msra.mxu0 0.0
    %720 = vmatprep.subr.mxu0 0.0
    %721 = vmatpush1.msra.mxu0 0.0
    %722 = vmatprep.subr.mxu0 0.0
    %723 = vmatpush1.msra.mxu0 0.0
    %724 = vmatprep.subr.mxu0 0.0
    %725 = vmatpush1.msra.mxu0 0.0
    %726 = vmatprep.subr.mxu0 0.0
    %727 = vmatpush1.msra.mxu0 0.0
    %728 = vmatprep.subr.mxu0 0.0
    %729 = vmatpush1.msra.mxu0 0.0
    %730 = vmatprep.subr.mxu0 0.0
    %731 = vmatpush1.msra.mxu0 0.0
    %732 = vmatprep.subr.mxu0 0.0
    %733 = vmatpush1.msra.mxu0 0.0
    %734 = vmatprep.subr.mxu0 0.0
    %735 = vmatpush1.msra.mxu0 0.0
    %736 = vmatprep.subr.mxu0 0.0
    %737 = vmatpush1.msra.mxu0 0.0
    %738 = vmatprep.subr.mxu0 0.0
    %739 = vmatpush1.msra.mxu0 0.0
    %740 = vmatprep.subr.mxu0 0.0
    %741 = vmatpush1.msra.mxu0 0.0
    %742 = vmatprep.subr.mxu0 0.0
    %743 = vmatpush1.msra.mxu0 %v118
    %744 = vmatprep.subr.mxu0 0.0
    %745 = vmatpush1.msra.mxu0 %v117
    %746 = vmatprep.subr.mxu0 0.0
    %747 = vmatpush1.msra.mxu0 %v116
    %748 = vmatprep.subr.mxu0 0.0
    %749 = vmatpush1.msra.mxu0 %v115
    %750 = vmatprep.subr.mxu0 0.0
    %751 = vmatpush2.msra.mxu0 0.0
    %752 = vmatprep.subr.mxu0 0.0
    %753 = vmatpush2.msra.mxu0 0.0
    %754 = vmatprep.subr.mxu0 0.0
    %755 = vmatpush2.msra.mxu0 0.0
    %756 = vmatprep.subr.mxu0 0.0
    %757 = vmatpush2.msra.mxu0 0.0
    %758 = vmatprep.subr.mxu0 0.0
    %759 = vmatpush2.msra.mxu0 0.0
    %760 = vmatprep.subr.mxu0 0.0
    %761 = vmatpush2.msra.mxu0 0.0
    %762 = vmatprep.subr.mxu0 0.0
    %763 = vmatpush2.msra.mxu0 0.0
    %764 = vmatprep.subr.mxu0 0.0
    %765 = vmatpush2.msra.mxu0 0.0
    %766 = vmatprep.subr.mxu0 0.0
    %767 = vmatpush2.msra.mxu0 0.0
    %768 = vmatprep.subr.mxu0 0.0
    %769 = vmatpush2.msra.mxu0 0.0
    %770 = vmatprep.subr.mxu0 0.0
    %771 = vmatpush2.msra.mxu0 0.0
    %772 = vmatprep.subr.mxu0 0.0
    %773 = vmatpush2.msra.mxu0 0.0
    %774 = vmatprep.subr.mxu0 0.0
    %775 = vmatpush2.msra.mxu0 0.0
    %776 = vmatprep.subr.mxu0 0.0
    %777 = vmatpush2.msra.mxu0 0.0
    %778 = vmatprep.subr.mxu0 0.0
    %779 = vmatpush2.msra.mxu0 0.0
    %780 = vmatprep.subr.mxu0 0.0
    %781 = vmatpush2.msra.mxu0 0.0
    %782 = vmatprep.mubr.f32.mxu0 0.0
    %783 = vmatmul.mubr.f32.gmra.mxu0 %v716
    %v784 = vpop.f32.mrf.mxu0
    %v785 = vadd.f32 0.0, %v784
    %v786 = vpop.f32.mrf.mxu0
    %787 = vdwg.mxu0
    %v788 = vadd.f32 %v712, %v785
    %v789 = vtanh.pop %v788
    %790 = vst.msk [vmem:[#allocation2 + $0x2] sm:$0x3] %vm564, %v789
    %v792 = vrot.slane %v644, 4
    %v793 = vsel %vm265, %v792, 0
    %795 = vmatprep.subr.mxu0 0.0
    %796 = vmatpush1.msra.mxu0 0.0
    %797 = vmatprep.subr.mxu0 0.0
    %798 = vmatpush1.msra.mxu0 0.0
    %799 = vmatprep.subr.mxu0 0.0
    %800 = vmatpush1.msra.mxu0 0.0
    %801 = vmatprep.subr.mxu0 0.0
    %802 = vmatpush1.msra.mxu0 0.0
    %803 = vmatprep.subr.mxu0 0.0
    %804 = vmatpush1.msra.mxu0 0.0
    %805 = vmatprep.subr.mxu0 0.0
    %806 = vmatpush1.msra.mxu0 0.0
    %807 = vmatprep.subr.mxu0 0.0
    %808 = vmatpush1.msra.mxu0 0.0
    %809 = vmatprep.subr.mxu0 0.0
    %810 = vmatpush1.msra.mxu0 0.0
    %811 = vmatprep.subr.mxu0 0.0
    %812 = vmatpush1.msra.mxu0 0.0
    %813 = vmatprep.subr.mxu0 0.0
    %814 = vmatpush1.msra.mxu0 0.0
    %815 = vmatprep.subr.mxu0 0.0
    %816 = vmatpush1.msra.mxu0 0.0
    %817 = vmatprep.subr.mxu0 0.0
    %818 = vmatpush1.msra.mxu0 0.0
    %819 = vmatprep.subr.mxu0 0.0
    %820 = vmatpush1.msra.mxu0 %v114
    %821 = vmatprep.subr.mxu0 0.0
    %822 = vmatpush1.msra.mxu0 %v113
    %823 = vmatprep.subr.mxu0 0.0
    %824 = vmatpush1.msra.mxu0 %v112
    %825 = vmatprep.subr.mxu0 0.0
    %826 = vmatpush1.msra.mxu0 %v111
    %827 = vmatprep.subr.mxu0 0.0
    %828 = vmatpush2.msra.mxu0 0.0
    %829 = vmatprep.subr.mxu0 0.0
    %830 = vmatpush2.msra.mxu0 0.0
    %831 = vmatprep.subr.mxu0 0.0
    %832 = vmatpush2.msra.mxu0 0.0
    %833 = vmatprep.subr.mxu0 0.0
    %834 = vmatpush2.msra.mxu0 0.0
    %835 = vmatprep.subr.mxu0 0.0
    %836 = vmatpush2.msra.mxu0 0.0
    %837 = vmatprep.subr.mxu0 0.0
    %838 = vmatpush2.msra.mxu0 0.0
    %839 = vmatprep.subr.mxu0 0.0
    %840 = vmatpush2.msra.mxu0 0.0
    %841 = vmatprep.subr.mxu0 0.0
    %842 = vmatpush2.msra.mxu0 0.0
    %843 = vmatprep.subr.mxu0 0.0
    %844 = vmatpush2.msra.mxu0 0.0
    %845 = vmatprep.subr.mxu0 0.0
    %846 = vmatpush2.msra.mxu0 0.0
    %847 = vmatprep.subr.mxu0 0.0
    %848 = vmatpush2.msra.mxu0 0.0
    %849 = vmatprep.subr.mxu0 0.0
    %850 = vmatpush2.msra.mxu0 0.0
    %851 = vmatprep.subr.mxu0 0.0
    %852 = vmatpush2.msra.mxu0 0.0
    %853 = vmatprep.subr.mxu0 0.0
    %854 = vmatpush2.msra.mxu0 0.0
    %855 = vmatprep.subr.mxu0 0.0
    %856 = vmatpush2.msra.mxu0 0.0
    %857 = vmatprep.subr.mxu0 0.0
    %858 = vmatpush2.msra.mxu0 0.0
    %859 = vmatprep.mubr.f32.mxu0 0.0
    %860 = vmatmul.mubr.f32.gmra.mxu0 %v793
    %v861 = vpop.f32.mrf.mxu0
    %v862 = vadd.f32 0.0, %v861
    %v863 = vpop.f32.mrf.mxu0
    %864 = vdwg.mxu0
    %v866 = vrot.slane %v862, 2
    %v868 = vadd.f32 %v254, %v866
    %v869 = vtanh.pop %v868
    %870 = vmatprep.subr.mxu0 0.0
    %871 = vmatpush1.msra.mxu0 0.0
    %872 = vmatprep.subr.mxu0 0.0
    %873 = vmatpush1.msra.mxu0 0.0
    %874 = vmatprep.subr.mxu0 0.0
    %875 = vmatpush1.msra.mxu0 0.0
    %876 = vmatprep.subr.mxu0 0.0
    %877 = vmatpush1.msra.mxu0 0.0
    %878 = vmatprep.subr.mxu0 0.0
    %879 = vmatpush1.msra.mxu0 0.0
    %880 = vmatprep.subr.mxu0 0.0
    %881 = vmatpush1.msra.mxu0 0.0
    %882 = vmatprep.subr.mxu0 0.0
    %883 = vmatpush1.msra.mxu0 0.0
    %884 = vmatprep.subr.mxu0 0.0
    %885 = vmatpush1.msra.mxu0 0.0
    %886 = vmatprep.subr.mxu0 0.0
    %887 = vmatpush1.msra.mxu0 0.0
    %888 = vmatprep.subr.mxu0 0.0
    %889 = vmatpush1.msra.mxu0 0.0
    %890 = vmatprep.subr.mxu0 0.0
    %891 = vmatpush1.msra.mxu0 0.0
    %892 = vmatprep.subr.mxu0 0.0
    %893 = vmatpush1.msra.mxu0 0.0
    %894 = vmatprep.subr.mxu0 0.0
    %895 = vmatpush1.msra.mxu0 %v110
    %896 = vmatprep.subr.mxu0 0.0
    %897 = vmatpush1.msra.mxu0 %v109
    %898 = vmatprep.subr.mxu0 0.0
    %899 = vmatpush1.msra.mxu0 %v108
    %900 = vmatprep.subr.mxu0 0.0
    %901 = vmatpush1.msra.mxu0 %v107
    %902 = vmatprep.subr.mxu0 0.0
    %903 = vmatpush2.msra.mxu0 0.0
    %904 = vmatprep.subr.mxu0 0.0
    %905 = vmatpush2.msra.mxu0 0.0
    %906 = vmatprep.subr.mxu0 0.0
    %907 = vmatpush2.msra.mxu0 0.0
    %908 = vmatprep.subr.mxu0 0.0
    %909 = vmatpush2.msra.mxu0 0.0
    %910 = vmatprep.subr.mxu0 0.0
    %911 = vmatpush2.msra.mxu0 0.0
    %912 = vmatprep.subr.mxu0 0.0
    %913 = vmatpush2.msra.mxu0 0.0
    %914 = vmatprep.subr.mxu0 0.0
    %915 = vmatpush2.msra.mxu0 0.0
    %916 = vmatprep.subr.mxu0 0.0
    %917 = vmatpush2.msra.mxu0 0.0
    %918 = vmatprep.subr.mxu0 0.0
    %919 = vmatpush2.msra.mxu0 0.0
    %920 = vmatprep.subr.mxu0 0.0
    %921 = vmatpush2.msra.mxu0 0.0
    %922 = vmatprep.subr.mxu0 0.0
    %923 = vmatpush2.msra.mxu0 0.0
    %924 = vmatprep.subr.mxu0 0.0
    %925 = vmatpush2.msra.mxu0 0.0
    %926 = vmatprep.subr.mxu0 0.0
    %927 = vmatpush2.msra.mxu0 0.0
    %928 = vmatprep.subr.mxu0 0.0
    %929 = vmatpush2.msra.mxu0 0.0
    %930 = vmatprep.subr.mxu0 0.0
    %931 = vmatpush2.msra.mxu0 0.0
    %932 = vmatprep.subr.mxu0 0.0
    %933 = vmatpush2.msra.mxu0 0.0
    %934 = vmatprep.mubr.f32.mxu0 0.0
    %935 = vmatmul.mubr.f32.gmra.mxu0 %v793
    %v936 = vpop.f32.mrf.mxu0
    %v937 = vadd.f32 %v125, %v936
    %v938 = vpop.f32.mrf.mxu0
    %939 = vdwg.mxu0
    %v941 = vsel %vm265, %v789, 0
    %943 = vmatprep.subr.mxu0 0.0
    %944 = vmatpush1.msra.mxu0 0.0
    %945 = vmatprep.subr.mxu0 0.0
    %946 = vmatpush1.msra.mxu0 0.0
    %947 = vmatprep.subr.mxu0 0.0
    %948 = vmatpush1.msra.mxu0 0.0
    %949 = vmatprep.subr.mxu0 0.0
    %950 = vmatpush1.msra.mxu0 0.0
    %951 = vmatprep.subr.mxu0 0.0
    %952 = vmatpush1.msra.mxu0 0.0
    %953 = vmatprep.subr.mxu0 0.0
    %954 = vmatpush1.msra.mxu0 0.0
    %955 = vmatprep.subr.mxu0 0.0
    %956 = vmatpush1.msra.mxu0 0.0
    %957 = vmatprep.subr.mxu0 0.0
    %958 = vmatpush1.msra.mxu0 0.0
    %959 = vmatprep.subr.mxu0 0.0
    %960 = vmatpush1.msra.mxu0 0.0
    %961 = vmatprep.subr.mxu0 0.0
    %962 = vmatpush1.msra.mxu0 0.0
    %963 = vmatprep.subr.mxu0 0.0
    %964 = vmatpush1.msra.mxu0 0.0
    %965 = vmatprep.subr.mxu0 0.0
    %966 = vmatpush1.msra.mxu0 0.0
    %967 = vmatprep.subr.mxu0 0.0
    %968 = vmatpush1.msra.mxu0 %v118
    %969 = vmatprep.subr.mxu0 0.0
    %970 = vmatpush1.msra.mxu0 %v117
    %971 = vmatprep.subr.mxu0 0.0
    %972 = vmatpush1.msra.mxu0 %v116
    %973 = vmatprep.subr.mxu0 0.0
    %974 = vmatpush1.msra.mxu0 %v115
    %975 = vmatprep.subr.mxu0 0.0
    %976 = vmatpush2.msra.mxu0 0.0
    %977 = vmatprep.subr.mxu0 0.0
    %978 = vmatpush2.msra.mxu0 0.0
    %979 = vmatprep.subr.mxu0 0.0
    %980 = vmatpush2.msra.mxu0 0.0
    %981 = vmatprep.subr.mxu0 0.0
    %982 = vmatpush2.msra.mxu0 0.0
    %983 = vmatprep.subr.mxu0 0.0
    %984 = vmatpush2.msra.mxu0 0.0
    %985 = vmatprep.subr.mxu0 0.0
    %986 = vmatpush2.msra.mxu0 0.0
    %987 = vmatprep.subr.mxu0 0.0
    %988 = vmatpush2.msra.mxu0 0.0
    %989 = vmatprep.subr.mxu0 0.0
    %990 = vmatpush2.msra.mxu0 0.0
    %991 = vmatprep.subr.mxu0 0.0
    %992 = vmatpush2.msra.mxu0 0.0
    %993 = vmatprep.subr.mxu0 0.0
    %994 = vmatpush2.msra.mxu0 0.0
    %995 = vmatprep.subr.mxu0 0.0
    %996 = vmatpush2.msra.mxu0 0.0
    %997 = vmatprep.subr.mxu0 0.0
    %998 = vmatpush2.msra.mxu0 0.0
    %999 = vmatprep.subr.mxu0 0.0
    %1000 = vmatpush2.msra.mxu0 0.0
    %1001 = vmatprep.subr.mxu0 0.0
    %1002 = vmatpush2.msra.mxu0 0.0
    %1003 = vmatprep.subr.mxu0 0.0
    %1004 = vmatpush2.msra.mxu0 0.0
    %1005 = vmatprep.subr.mxu0 0.0
    %1006 = vmatpush2.msra.mxu0 0.0
    %1007 = vmatprep.mubr.f32.mxu0 0.0
    %1008 = vmatmul.mubr.f32.gmra.mxu0 %v941
    %v1009 = vpop.f32.mrf.mxu0
    %v1010 = vadd.f32 0.0, %v1009
    %v1011 = vpop.f32.mrf.mxu0
    %1012 = vdwg.mxu0
    %v1013 = vadd.f32 %v937, %v1010
    %v1014 = vtanh.pop %v1013
    %1015 = vst.msk [vmem:[#allocation2 + $0x4] sm:$0x3] %vm564, %v1014
    %v1017 = vrot.slane %v869, 6
    %v1018 = vsel %vm265, %v1017, 0
    %1020 = vmatprep.subr.mxu0 0.0
    %1021 = vmatpush1.msra.mxu0 0.0
    %1022 = vmatprep.subr.mxu0 0.0
    %1023 = vmatpush1.msra.mxu0 0.0
    %1024 = vmatprep.subr.mxu0 0.0
    %1025 = vmatpush1.msra.mxu0 0.0
    %1026 = vmatprep.subr.mxu0 0.0
    %1027 = vmatpush1.msra.mxu0 0.0
    %1028 = vmatprep.subr.mxu0 0.0
    %1029 = vmatpush1.msra.mxu0 0.0
    %1030 = vmatprep.subr.mxu0 0.0
    %1031 = vmatpush1.msra.mxu0 0.0
    %1032 = vmatprep.subr.mxu0 0.0
    %1033 = vmatpush1.msra.mxu0 0.0
    %1034 = vmatprep.subr.mxu0 0.0
    %1035 = vmatpush1.msra.mxu0 0.0
    %1036 = vmatprep.subr.mxu0 0.0
    %1037 = vmatpush1.msra.mxu0 0.0
    %1038 = vmatprep.subr.mxu0 0.0
    %1039 = vmatpush1.msra.mxu0 0.0
    %1040 = vmatprep.subr.mxu0 0.0
    %1041 = vmatpush1.msra.mxu0 0.0
    %1042 = vmatprep.subr.mxu0 0.0
    %1043 = vmatpush1.msra.mxu0 0.0
    %1044 = vmatprep.subr.mxu0 0.0
    %1045 = vmatpush1.msra.mxu0 %v114
    %1046 = vmatprep.subr.mxu0 0.0
    %1047 = vmatpush1.msra.mxu0 %v113
    %1048 = vmatprep.subr.mxu0 0.0
    %1049 = vmatpush1.msra.mxu0 %v112
    %1050 = vmatprep.subr.mxu0 0.0
    %1051 = vmatpush1.msra.mxu0 %v111
    %1052 = vmatprep.subr.mxu0 0.0
    %1053 = vmatpush2.msra.mxu0 0.0
    %1054 = vmatprep.subr.mxu0 0.0
    %1055 = vmatpush2.msra.mxu0 0.0
    %1056 = vmatprep.subr.mxu0 0.0
    %1057 = vmatpush2.msra.mxu0 0.0
    %1058 = vmatprep.subr.mxu0 0.0
    %1059 = vmatpush2.msra.mxu0 0.0
    %1060 = vmatprep.subr.mxu0 0.0
    %1061 = vmatpush2.msra.mxu0 0.0
    %1062 = vmatprep.subr.mxu0 0.0
    %1063 = vmatpush2.msra.mxu0 0.0
    %1064 = vmatprep.subr.mxu0 0.0
    %1065 = vmatpush2.msra.mxu0 0.0
    %1066 = vmatprep.subr.mxu0 0.0
    %1067 = vmatpush2.msra.mxu0 0.0
    %1068 = vmatprep.subr.mxu0 0.0
    %1069 = vmatpush2.msra.mxu0 0.0
    %1070 = vmatprep.subr.mxu0 0.0
    %1071 = vmatpush2.msra.mxu0 0.0
    %1072 = vmatprep.subr.mxu0 0.0
    %1073 = vmatpush2.msra.mxu0 0.0
    %1074 = vmatprep.subr.mxu0 0.0
    %1075 = vmatpush2.msra.mxu0 0.0
    %1076 = vmatprep.subr.mxu0 0.0
    %1077 = vmatpush2.msra.mxu0 0.0
    %1078 = vmatprep.subr.mxu0 0.0
    %1079 = vmatpush2.msra.mxu0 0.0
    %1080 = vmatprep.subr.mxu0 0.0
    %1081 = vmatpush2.msra.mxu0 0.0
    %1082 = vmatprep.subr.mxu0 0.0
    %1083 = vmatpush2.msra.mxu0 0.0
    %1084 = vmatprep.mubr.f32.mxu0 0.0
    %1085 = vmatmul.mubr.f32.gmra.mxu0 %v1018
    %v1086 = vpop.f32.mrf.mxu0
    %v1087 = vadd.f32 0.0, %v1086
    %v1088 = vpop.f32.mrf.mxu0
    %1089 = vdwg.mxu0
    %v1090 = vadd.f32 %v259, %v1087
    %v1091 = vtanh.pop %v1090
    %1092 = vmatprep.subr.mxu0 0.0
    %1093 = vmatpush1.msra.mxu0 0.0
    %1094 = vmatprep.subr.mxu0 0.0
    %1095 = vmatpush1.msra.mxu0 0.0
    %1096 = vmatprep.subr.mxu0 0.0
    %1097 = vmatpush1.msra.mxu0 0.0
    %1098 = vmatprep.subr.mxu0 0.0
    %1099 = vmatpush1.msra.mxu0 0.0
    %1100 = vmatprep.subr.mxu0 0.0
    %1101 = vmatpush1.msra.mxu0 0.0
    %1102 = vmatprep.subr.mxu0 0.0
    %1103 = vmatpush1.msra.mxu0 0.0
    %1104 = vmatprep.subr.mxu0 0.0
    %1105 = vmatpush1.msra.mxu0 0.0
    %1106 = vmatprep.subr.mxu0 0.0
    %1107 = vmatpush1.msra.mxu0 0.0
    %1108 = vmatprep.subr.mxu0 0.0
    %1109 = vmatpush1.msra.mxu0 0.0
    %1110 = vmatprep.subr.mxu0 0.0
    %1111 = vmatpush1.msra.mxu0 0.0
    %1112 = vmatprep.subr.mxu0 0.0
    %1113 = vmatpush1.msra.mxu0 0.0
    %1114 = vmatprep.subr.mxu0 0.0
    %1115 = vmatpush1.msra.mxu0 0.0
    %1116 = vmatprep.subr.mxu0 0.0
    %1117 = vmatpush1.msra.mxu0 %v110
    %1118 = vmatprep.subr.mxu0 0.0
    %1119 = vmatpush1.msra.mxu0 %v109
    %1120 = vmatprep.subr.mxu0 0.0
    %1121 = vmatpush1.msra.mxu0 %v108
    %1122 = vmatprep.subr.mxu0 0.0
    %1123 = vmatpush1.msra.mxu0 %v107
    %1124 = vmatprep.subr.mxu0 0.0
    %1125 = vmatpush2.msra.mxu0 0.0
    %1126 = vmatprep.subr.mxu0 0.0
    %1127 = vmatpush2.msra.mxu0 0.0
    %1128 = vmatprep.subr.mxu0 0.0
    %1129 = vmatpush2.msra.mxu0 0.0
    %1130 = vmatprep.subr.mxu0 0.0
    %1131 = vmatpush2.msra.mxu0 0.0
    %1132 = vmatprep.subr.mxu0 0.0
    %1133 = vmatpush2.msra.mxu0 0.0
    %1134 = vmatprep.subr.mxu0 0.0
    %1135 = vmatpush2.msra.mxu0 0.0
    %1136 = vmatprep.subr.mxu0 0.0
    %1137 = vmatpush2.msra.mxu0 0.0
    %1138 = vmatprep.subr.mxu0 0.0
    %1139 = vmatpush2.msra.mxu0 0.0
    %1140 = vmatprep.subr.mxu0 0.0
    %1141 = vmatpush2.msra.mxu0 0.0
    %1142 = vmatprep.subr.mxu0 0.0
    %1143 = vmatpush2.msra.mxu0 0.0
    %1144 = vmatprep.subr.mxu0 0.0
    %1145 = vmatpush2.msra.mxu0 0.0
    %1146 = vmatprep.subr.mxu0 0.0
    %1147 = vmatpush2.msra.mxu0 0.0
    %1148 = vmatprep.subr.mxu0 0.0
    %1149 = vmatpush2.msra.mxu0 0.0
    %1150 = vmatprep.subr.mxu0 0.0
    %1151 = vmatpush2.msra.mxu0 0.0
    %1152 = vmatprep.subr.mxu0 0.0
    %1153 = vmatpush2.msra.mxu0 0.0
    %1154 = vmatprep.subr.mxu0 0.0
    %1155 = vmatpush2.msra.mxu0 0.0
    %1156 = vmatprep.mubr.f32.mxu0 0.0
    %1157 = vmatmul.mubr.f32.gmra.mxu0 %v1018
    %v1158 = vpop.f32.mrf.mxu0
    %v1159 = vadd.f32 %v125, %v1158
    %v1160 = vpop.f32.mrf.mxu0
    %1161 = vdwg.mxu0
    %v1163 = vsel %vm265, %v1014, 0
    %1165 = vmatprep.subr.mxu0 0.0
    %1166 = vmatpush1.msra.mxu0 0.0
    %1167 = vmatprep.subr.mxu0 0.0
    %1168 = vmatpush1.msra.mxu0 0.0
    %1169 = vmatprep.subr.mxu0 0.0
    %1170 = vmatpush1.msra.mxu0 0.0
    %1171 = vmatprep.subr.mxu0 0.0
    %1172 = vmatpush1.msra.mxu0 0.0
    %1173 = vmatprep.subr.mxu0 0.0
    %1174 = vmatpush1.msra.mxu0 0.0
    %1175 = vmatprep.subr.mxu0 0.0
    %1176 = vmatpush1.msra.mxu0 0.0
    %1177 = vmatprep.subr.mxu0 0.0
    %1178 = vmatpush1.msra.mxu0 0.0
    %1179 = vmatprep.subr.mxu0 0.0
    %1180 = vmatpush1.msra.mxu0 0.0
    %1181 = vmatprep.subr.mxu0 0.0
    %1182 = vmatpush1.msra.mxu0 0.0
    %1183 = vmatprep.subr.mxu0 0.0
    %1184 = vmatpush1.msra.mxu0 0.0
    %1185 = vmatprep.subr.mxu0 0.0
    %1186 = vmatpush1.msra.mxu0 0.0
    %1187 = vmatprep.subr.mxu0 0.0
    %1188 = vmatpush1.msra.mxu0 0.0
    %1189 = vmatprep.subr.mxu0 0.0
    %1190 = vmatpush1.msra.mxu0 %v118
    %1191 = vmatprep.subr.mxu0 0.0
    %1192 = vmatpush1.msra.mxu0 %v117
    %1193 = vmatprep.subr.mxu0 0.0
    %1194 = vmatpush1.msra.mxu0 %v116
    %1195 = vmatprep.subr.mxu0 0.0
    %1196 = vmatpush1.msra.mxu0 %v115
    %1197 = vmatprep.subr.mxu0 0.0
    %1198 = vmatpush2.msra.mxu0 0.0
    %1199 = vmatprep.subr.mxu0 0.0
    %1200 = vmatpush2.msra.mxu0 0.0
    %1201 = vmatprep.subr.mxu0 0.0
    %1202 = vmatpush2.msra.mxu0 0.0
    %1203 = vmatprep.subr.mxu0 0.0
    %1204 = vmatpush2.msra.mxu0 0.0
    %1205 = vmatprep.subr.mxu0 0.0
    %1206 = vmatpush2.msra.mxu0 0.0
    %1207 = vmatprep.subr.mxu0 0.0
    %1208 = vmatpush2.msra.mxu0 0.0
    %1209 = vmatprep.subr.mxu0 0.0
    %1210 = vmatpush2.msra.mxu0 0.0
    %1211 = vmatprep.subr.mxu0 0.0
    %1212 = vmatpush2.msra.mxu0 0.0
    %1213 = vmatprep.subr.mxu0 0.0
    %1214 = vmatpush2.msra.mxu0 0.0
    %1215 = vmatprep.subr.mxu0 0.0
    %1216 = vmatpush2.msra.mxu0 0.0
    %1217 = vmatprep.subr.mxu0 0.0
    %1218 = vmatpush2.msra.mxu0 0.0
    %1219 = vmatprep.subr.mxu0 0.0
    %1220 = vmatpush2.msra.mxu0 0.0
    %1221 = vmatprep.subr.mxu0 0.0
    %1222 = vmatpush2.msra.mxu0 0.0
    %1223 = vmatprep.subr.mxu0 0.0
    %1224 = vmatpush2.msra.mxu0 0.0
    %1225 = vmatprep.subr.mxu0 0.0
    %1226 = vmatpush2.msra.mxu0 0.0
    %1227 = vmatprep.subr.mxu0 0.0
    %1228 = vmatpush2.msra.mxu0 0.0
    %1229 = vmatprep.mubr.f32.mxu0 0.0
    %1230 = vmatmul.mubr.f32.gmra.mxu0 %v1163
    %v1231 = vpop.f32.mrf.mxu0
    %v1232 = vadd.f32 0.0, %v1231
    %v1233 = vpop.f32.mrf.mxu0
    %1234 = vdwg.mxu0
    %v1235 = vadd.f32 %v1159, %v1232
    %v1236 = vtanh.pop %v1235
    %1237 = vst.msk [vmem:[#allocation2 + $0x6] sm:$0x3] %vm564, %v1236
    %v1239 = vsel %vm265, %v1091, 0
    %1241 = vmatprep.subr.mxu0 0.0
    %1242 = vmatpush1.msra.mxu0 0.0
    %1243 = vmatprep.subr.mxu0 0.0
    %1244 = vmatpush1.msra.mxu0 0.0
    %1245 = vmatprep.subr.mxu0 0.0
    %1246 = vmatpush1.msra.mxu0 0.0
    %1247 = vmatprep.subr.mxu0 0.0
    %1248 = vmatpush1.msra.mxu0 0.0
    %1249 = vmatprep.subr.mxu0 0.0
    %1250 = vmatpush1.msra.mxu0 0.0
    %1251 = vmatprep.subr.mxu0 0.0
    %1252 = vmatpush1.msra.mxu0 0.0
    %1253 = vmatprep.subr.mxu0 0.0
    %1254 = vmatpush1.msra.mxu0 0.0
    %1255 = vmatprep.subr.mxu0 0.0
    %1256 = vmatpush1.msra.mxu0 0.0
    %1257 = vmatprep.subr.mxu0 0.0
    %1258 = vmatpush1.msra.mxu0 0.0
    %1259 = vmatprep.subr.mxu0 0.0
    %1260 = vmatpush1.msra.mxu0 0.0
    %1261 = vmatprep.subr.mxu0 0.0
    %1262 = vmatpush1.msra.mxu0 0.0
    %1263 = vmatprep.subr.mxu0 0.0
    %1264 = vmatpush1.msra.mxu0 0.0
    %1265 = vmatprep.subr.mxu0 0.0
    %1266 = vmatpush1.msra.mxu0 %v114
    %1267 = vmatprep.subr.mxu0 0.0
    %1268 = vmatpush1.msra.mxu0 %v113
    %1269 = vmatprep.subr.mxu0 0.0
    %1270 = vmatpush1.msra.mxu0 %v112
    %1271 = vmatprep.subr.mxu0 0.0
    %1272 = vmatpush1.msra.mxu0 %v111
    %1273 = vmatprep.subr.mxu0 0.0
    %1274 = vmatpush2.msra.mxu0 0.0
    %1275 = vmatprep.subr.mxu0 0.0
    %1276 = vmatpush2.msra.mxu0 0.0
    %1277 = vmatprep.subr.mxu0 0.0
    %1278 = vmatpush2.msra.mxu0 0.0
    %1279 = vmatprep.subr.mxu0 0.0
    %1280 = vmatpush2.msra.mxu0 0.0
    %1281 = vmatprep.subr.mxu0 0.0
    %1282 = vmatpush2.msra.mxu0 0.0
    %1283 = vmatprep.subr.mxu0 0.0
    %1284 = vmatpush2.msra.mxu0 0.0
    %1285 = vmatprep.subr.mxu0 0.0
    %1286 = vmatpush2.msra.mxu0 0.0
    %1287 = vmatprep.subr.mxu0 0.0
    %1288 = vmatpush2.msra.mxu0 0.0
    %1289 = vmatprep.subr.mxu0 0.0
    %1290 = vmatpush2.msra.mxu0 0.0
    %1291 = vmatprep.subr.mxu0 0.0
    %1292 = vmatpush2.msra.mxu0 0.0
    %1293 = vmatprep.subr.mxu0 0.0
    %1294 = vmatpush2.msra.mxu0 0.0
    %1295 = vmatprep.subr.mxu0 0.0
    %1296 = vmatpush2.msra.mxu0 0.0
    %1297 = vmatprep.subr.mxu0 0.0
    %1298 = vmatpush2.msra.mxu0 0.0
    %1299 = vmatprep.subr.mxu0 0.0
    %1300 = vmatpush2.msra.mxu0 0.0
    %1301 = vmatprep.subr.mxu0 0.0
    %1302 = vmatpush2.msra.mxu0 0.0
    %1303 = vmatprep.subr.mxu0 0.0
    %1304 = vmatpush2.msra.mxu0 0.0
    %1305 = vmatprep.mubr.f32.mxu0 0.0
    %1306 = vmatmul.mubr.f32.gmra.mxu0 %v1239
    %v1307 = vpop.f32.mrf.mxu0
    %v1308 = vadd.f32 0.0, %v1307
    %v1309 = vpop.f32.mrf.mxu0
    %1310 = vdwg.mxu0
    %v1312 = vrot.slane %v1308, 6
    %v1314 = vadd.f32 %v259, %v1312
    %v1315 = vtanh.pop %v1314
    %1316 = vmatprep.subr.mxu0 0.0
    %1317 = vmatpush1.msra.mxu0 0.0
    %1318 = vmatprep.subr.mxu0 0.0
    %1319 = vmatpush1.msra.mxu0 0.0
    %1320 = vmatprep.subr.mxu0 0.0
    %1321 = vmatpush1.msra.mxu0 0.0
    %1322 = vmatprep.subr.mxu0 0.0
    %1323 = vmatpush1.msra.mxu0 0.0
    %1324 = vmatprep.subr.mxu0 0.0
    %1325 = vmatpush1.msra.mxu0 0.0
    %1326 = vmatprep.subr.mxu0 0.0
    %1327 = vmatpush1.msra.mxu0 0.0
    %1328 = vmatprep.subr.mxu0 0.0
    %1329 = vmatpush1.msra.mxu0 0.0
    %1330 = vmatprep.subr.mxu0 0.0
    %1331 = vmatpush1.msra.mxu0 0.0
    %1332 = vmatprep.subr.mxu0 0.0
    %1333 = vmatpush1.msra.mxu0 0.0
    %1334 = vmatprep.subr.mxu0 0.0
    %1335 = vmatpush1.msra.mxu0 0.0
    %1336 = vmatprep.subr.mxu0 0.0
    %1337 = vmatpush1.msra.mxu0 0.0
    %1338 = vmatprep.subr.mxu0 0.0
    %1339 = vmatpush1.msra.mxu0 0.0
    %1340 = vmatprep.subr.mxu0 0.0
    %1341 = vmatpush1.msra.mxu0 %v110
    %1342 = vmatprep.subr.mxu0 0.0
    %1343 = vmatpush1.msra.mxu0 %v109
    %1344 = vmatprep.subr.mxu0 0.0
    %1345 = vmatpush1.msra.mxu0 %v108
    %1346 = vmatprep.subr.mxu0 0.0
    %1347 = vmatpush1.msra.mxu0 %v107
    %1348 = vmatprep.subr.mxu0 0.0
    %1349 = vmatpush2.msra.mxu0 0.0
    %1350 = vmatprep.subr.mxu0 0.0
    %1351 = vmatpush2.msra.mxu0 0.0
    %1352 = vmatprep.subr.mxu0 0.0
    %1353 = vmatpush2.msra.mxu0 0.0
    %1354 = vmatprep.subr.mxu0 0.0
    %1355 = vmatpush2.msra.mxu0 0.0
    %1356 = vmatprep.subr.mxu0 0.0
    %1357 = vmatpush2.msra.mxu0 0.0
    %1358 = vmatprep.subr.mxu0 0.0
    %1359 = vmatpush2.msra.mxu0 0.0
    %1360 = vmatprep.subr.mxu0 0.0
    %1361 = vmatpush2.msra.mxu0 0.0
    %1362 = vmatprep.subr.mxu0 0.0
    %1363 = vmatpush2.msra.mxu0 0.0
    %1364 = vmatprep.subr.mxu0 0.0
    %1365 = vmatpush2.msra.mxu0 0.0
    %1366 = vmatprep.subr.mxu0 0.0
    %1367 = vmatpush2.msra.mxu0 0.0
    %1368 = vmatprep.subr.mxu0 0.0
    %1369 = vmatpush2.msra.mxu0 0.0
    %1370 = vmatprep.subr.mxu0 0.0
    %1371 = vmatpush2.msra.mxu0 0.0
    %1372 = vmatprep.subr.mxu0 0.0
    %1373 = vmatpush2.msra.mxu0 0.0
    %1374 = vmatprep.subr.mxu0 0.0
    %1375 = vmatpush2.msra.mxu0 0.0
    %1376 = vmatprep.subr.mxu0 0.0
    %1377 = vmatpush2.msra.mxu0 0.0
    %1378 = vmatprep.subr.mxu0 0.0
    %1379 = vmatpush2.msra.mxu0 0.0
    %1380 = vmatprep.mubr.f32.mxu0 0.0
    %1381 = vmatmul.mubr.f32.gmra.mxu0 %v1239
    %v1382 = vpop.f32.mrf.mxu0
    %v1383 = vadd.f32 %v125, %v1382
    %v1384 = vpop.f32.mrf.mxu0
    %1385 = vdwg.mxu0
    %v1387 = vsel %vm265, %v1236, 0
    %1389 = vmatprep.subr.mxu0 0.0
    %1390 = vmatpush1.msra.mxu0 0.0
    %1391 = vmatprep.subr.mxu0 0.0
    %1392 = vmatpush1.msra.mxu0 0.0
    %1393 = vmatprep.subr.mxu0 0.0
    %1394 = vmatpush1.msra.mxu0 0.0
    %1395 = vmatprep.subr.mxu0 0.0
    %1396 = vmatpush1.msra.mxu0 0.0
    %1397 = vmatprep.subr.mxu0 0.0
    %1398 = vmatpush1.msra.mxu0 0.0
    %1399 = vmatprep.subr.mxu0 0.0
    %1400 = vmatpush1.msra.mxu0 0.0
    %1401 = vmatprep.subr.mxu0 0.0
    %1402 = vmatpush1.msra.mxu0 0.0
    %1403 = vmatprep.subr.mxu0 0.0
    %1404 = vmatpush1.msra.mxu0 0.0
    %1405 = vmatprep.subr.mxu0 0.0
    %1406 = vmatpush1.msra.mxu0 0.0
    %1407 = vmatprep.subr.mxu0 0.0
    %1408 = vmatpush1.msra.mxu0 0.0
    %1409 = vmatprep.subr.mxu0 0.0
    %1410 = vmatpush1.msra.mxu0 0.0
    %1411 = vmatprep.subr.mxu0 0.0
    %1412 = vmatpush1.msra.mxu0 0.0
    %1413 = vmatprep.subr.mxu0 0.0
    %1414 = vmatpush1.msra.mxu0 %v118
    %1415 = vmatprep.subr.mxu0 0.0
    %1416 = vmatpush1.msra.mxu0 %v117
    %1417 = vmatprep.subr.mxu0 0.0
    %1418 = vmatpush1.msra.mxu0 %v116
    %1419 = vmatprep.subr.mxu0 0.0
    %1420 = vmatpush1.msra.mxu0 %v115
    %1421 = vmatprep.subr.mxu0 0.0
    %1422 = vmatpush2.msra.mxu0 0.0
    %1423 = vmatprep.subr.mxu0 0.0
    %1424 = vmatpush2.msra.mxu0 0.0
    %1425 = vmatprep.subr.mxu0 0.0
    %1426 = vmatpush2.msra.mxu0 0.0
    %1427 = vmatprep.subr.mxu0 0.0
    %1428 = vmatpush2.msra.mxu0 0.0
    %1429 = vmatprep.subr.mxu0 0.0
    %1430 = vmatpush2.msra.mxu0 0.0
    %1431 = vmatprep.subr.mxu0 0.0
    %1432 = vmatpush2.msra.mxu0 0.0
    %1433 = vmatprep.subr.mxu0 0.0
    %1434 = vmatpush2.msra.mxu0 0.0
    %1435 = vmatprep.subr.mxu0 0.0
    %1436 = vmatpush2.msra.mxu0 0.0
    %1437 = vmatprep.subr.mxu0 0.0
    %1438 = vmatpush2.msra.mxu0 0.0
    %1439 = vmatprep.subr.mxu0 0.0
    %1440 = vmatpush2.msra.mxu0 0.0
    %1441 = vmatprep.subr.mxu0 0.0
    %1442 = vmatpush2.msra.mxu0 0.0
    %1443 = vmatprep.subr.mxu0 0.0
    %1444 = vmatpush2.msra.mxu0 0.0
    %1445 = vmatprep.subr.mxu0 0.0
    %1446 = vmatpush2.msra.mxu0 0.0
    %1447 = vmatprep.subr.mxu0 0.0
    %1448 = vmatpush2.msra.mxu0 0.0
    %1449 = vmatprep.subr.mxu0 0.0
    %1450 = vmatpush2.msra.mxu0 0.0
    %1451 = vmatprep.subr.mxu0 0.0
    %1452 = vmatpush2.msra.mxu0 0.0
    %1453 = vmatprep.mubr.f32.mxu0 0.0
    %1454 = vmatmul.mubr.f32.gmra.mxu0 %v1387
    %v1455 = vpop.f32.mrf.mxu0
    %v1456 = vadd.f32 0.0, %v1455
    %v1457 = vpop.f32.mrf.mxu0
    %1458 = vdwg.mxu0
    %v1459 = vadd.f32 %v1383, %v1456
    %v1460 = vtanh.pop %v1459
    %1461 = vst.msk [vmem:[#allocation2 + $0x8] sm:$0x3] %vm564, %v1460
    %v1463 = vrot.slane %v1315, 2
    %v1464 = vsel %vm265, %v1463, 0
    %1466 = vmatprep.subr.mxu0 0.0
    %1467 = vmatpush1.msra.mxu0 0.0
    %1468 = vmatprep.subr.mxu0 0.0
    %1469 = vmatpush1.msra.mxu0 0.0
    %1470 = vmatprep.subr.mxu0 0.0
    %1471 = vmatpush1.msra.mxu0 0.0
    %1472 = vmatprep.subr.mxu0 0.0
    %1473 = vmatpush1.msra.mxu0 0.0
    %1474 = vmatprep.subr.mxu0 0.0
    %1475 = vmatpush1.msra.mxu0 0.0
    %1476 = vmatprep.subr.mxu0 0.0
    %1477 = vmatpush1.msra.mxu0 0.0
    %1478 = vmatprep.subr.mxu0 0.0
    %1479 = vmatpush1.msra.mxu0 0.0
    %1480 = vmatprep.subr.mxu0 0.0
    %1481 = vmatpush1.msra.mxu0 0.0
    %1482 = vmatprep.subr.mxu0 0.0
    %1483 = vmatpush1.msra.mxu0 0.0
    %1484 = vmatprep.subr.mxu0 0.0
    %1485 = vmatpush1.msra.mxu0 0.0
    %1486 = vmatprep.subr.mxu0 0.0
    %1487 = vmatpush1.msra.mxu0 0.0
    %1488 = vmatprep.subr.mxu0 0.0
    %1489 = vmatpush1.msra.mxu0 0.0
    %1490 = vmatprep.subr.mxu0 0.0
    %1491 = vmatpush1.msra.mxu0 %v114
    %1492 = vmatprep.subr.mxu0 0.0
    %1493 = vmatpush1.msra.mxu0 %v113
    %1494 = vmatprep.subr.mxu0 0.0
    %1495 = vmatpush1.msra.mxu0 %v112
    %1496 = vmatprep.subr.mxu0 0.0
    %1497 = vmatpush1.msra.mxu0 %v111
    %1498 = vmatprep.subr.mxu0 0.0
    %1499 = vmatpush2.msra.mxu0 0.0
    %1500 = vmatprep.subr.mxu0 0.0
    %1501 = vmatpush2.msra.mxu0 0.0
    %1502 = vmatprep.subr.mxu0 0.0
    %1503 = vmatpush2.msra.mxu0 0.0
    %1504 = vmatprep.subr.mxu0 0.0
    %1505 = vmatpush2.msra.mxu0 0.0
    %1506 = vmatprep.subr.mxu0 0.0
    %1507 = vmatpush2.msra.mxu0 0.0
    %1508 = vmatprep.subr.mxu0 0.0
    %1509 = vmatpush2.msra.mxu0 0.0
    %1510 = vmatprep.subr.mxu0 0.0
    %1511 = vmatpush2.msra.mxu0 0.0
    %1512 = vmatprep.subr.mxu0 0.0
    %1513 = vmatpush2.msra.mxu0 0.0
    %1514 = vmatprep.subr.mxu0 0.0
    %1515 = vmatpush2.msra.mxu0 0.0
    %1516 = vmatprep.subr.mxu0 0.0
    %1517 = vmatpush2.msra.mxu0 0.0
    %1518 = vmatprep.subr.mxu0 0.0
    %1519 = vmatpush2.msra.mxu0 0.0
    %1520 = vmatprep.subr.mxu0 0.0
    %1521 = vmatpush2.msra.mxu0 0.0
    %1522 = vmatprep.subr.mxu0 0.0
    %1523 = vmatpush2.msra.mxu0 0.0
    %1524 = vmatprep.subr.mxu0 0.0
    %1525 = vmatpush2.msra.mxu0 0.0
    %1526 = vmatprep.subr.mxu0 0.0
    %1527 = vmatpush2.msra.mxu0 0.0
    %1528 = vmatprep.subr.mxu0 0.0
    %1529 = vmatpush2.msra.mxu0 0.0
    %1530 = vmatprep.mubr.f32.mxu0 0.0
    %1531 = vmatmul.mubr.f32.gmra.mxu0 %v1464
    %v1532 = vpop.f32.mrf.mxu0
    %v1533 = vadd.f32 0.0, %v1532
    %v1534 = vpop.f32.mrf.mxu0
    %1535 = vdwg.mxu0
    %v1537 = vrot.slane %v1533, 4
    %v1539 = vadd.f32 %v259, %v1537
    %v1540 = vtanh.pop %v1539
    %1541 = vmatprep.subr.mxu0 0.0
    %1542 = vmatpush1.msra.mxu0 0.0
    %1543 = vmatprep.subr.mxu0 0.0
    %1544 = vmatpush1.msra.mxu0 0.0
    %1545 = vmatprep.subr.mxu0 0.0
    %1546 = vmatpush1.msra.mxu0 0.0
    %1547 = vmatprep.subr.mxu0 0.0
    %1548 = vmatpush1.msra.mxu0 0.0
    %1549 = vmatprep.subr.mxu0 0.0
    %1550 = vmatpush1.msra.mxu0 0.0
    %1551 = vmatprep.subr.mxu0 0.0
    %1552 = vmatpush1.msra.mxu0 0.0
    %1553 = vmatprep.subr.mxu0 0.0
    %1554 = vmatpush1.msra.mxu0 0.0
    %1555 = vmatprep.subr.mxu0 0.0
    %1556 = vmatpush1.msra.mxu0 0.0
    %1557 = vmatprep.subr.mxu0 0.0
    %1558 = vmatpush1.msra.mxu0 0.0
    %1559 = vmatprep.subr.mxu0 0.0
    %1560 = vmatpush1.msra.mxu0 0.0
    %1561 = vmatprep.subr.mxu0 0.0
    %1562 = vmatpush1.msra.mxu0 0.0
    %1563 = vmatprep.subr.mxu0 0.0
    %1564 = vmatpush1.msra.mxu0 0.0
    %1565 = vmatprep.subr.mxu0 0.0
    %1566 = vmatpush1.msra.mxu0 %v110
    %1567 = vmatprep.subr.mxu0 0.0
    %1568 = vmatpush1.msra.mxu0 %v109
    %1569 = vmatprep.subr.mxu0 0.0
    %1570 = vmatpush1.msra.mxu0 %v108
    %1571 = vmatprep.subr.mxu0 0.0
    %1572 = vmatpush1.msra.mxu0 %v107
    %1573 = vmatprep.subr.mxu0 0.0
    %1574 = vmatpush2.msra.mxu0 0.0
    %1575 = vmatprep.subr.mxu0 0.0
    %1576 = vmatpush2.msra.mxu0 0.0
    %1577 = vmatprep.subr.mxu0 0.0
    %1578 = vmatpush2.msra.mxu0 0.0
    %1579 = vmatprep.subr.mxu0 0.0
    %1580 = vmatpush2.msra.mxu0 0.0
    %1581 = vmatprep.subr.mxu0 0.0
    %1582 = vmatpush2.msra.mxu0 0.0
    %1583 = vmatprep.subr.mxu0 0.0
    %1584 = vmatpush2.msra.mxu0 0.0
    %1585 = vmatprep.subr.mxu0 0.0
    %1586 = vmatpush2.msra.mxu0 0.0
    %1587 = vmatprep.subr.mxu0 0.0
    %1588 = vmatpush2.msra.mxu0 0.0
    %1589 = vmatprep.subr.mxu0 0.0
    %1590 = vmatpush2.msra.mxu0 0.0
    %1591 = vmatprep.subr.mxu0 0.0
    %1592 = vmatpush2.msra.mxu0 0.0
    %1593 = vmatprep.subr.mxu0 0.0
    %1594 = vmatpush2.msra.mxu0 0.0
    %1595 = vmatprep.subr.mxu0 0.0
    %1596 = vmatpush2.msra.mxu0 0.0
    %1597 = vmatprep.subr.mxu0 0.0
    %1598 = vmatpush2.msra.mxu0 0.0
    %1599 = vmatprep.subr.mxu0 0.0
    %1600 = vmatpush2.msra.mxu0 0.0
    %1601 = vmatprep.subr.mxu0 0.0
    %1602 = vmatpush2.msra.mxu0 0.0
    %1603 = vmatprep.subr.mxu0 0.0
    %1604 = vmatpush2.msra.mxu0 0.0
    %1605 = vmatprep.mubr.f32.mxu0 0.0
    %1606 = vmatmul.mubr.f32.gmra.mxu0 %v1464
    %v1607 = vpop.f32.mrf.mxu0
    %v1608 = vadd.f32 %v125, %v1607
    %v1609 = vpop.f32.mrf.mxu0
    %1610 = vdwg.mxu0
    %v1612 = vsel %vm265, %v1460, 0
    %1614 = vmatprep.subr.mxu0 0.0
    %1615 = vmatpush1.msra.mxu0 0.0
    %1616 = vmatprep.subr.mxu0 0.0
    %1617 = vmatpush1.msra.mxu0 0.0
    %1618 = vmatprep.subr.mxu0 0.0
    %1619 = vmatpush1.msra.mxu0 0.0
    %1620 = vmatprep.subr.mxu0 0.0
    %1621 = vmatpush1.msra.mxu0 0.0
    %1622 = vmatprep.subr.mxu0 0.0
    %1623 = vmatpush1.msra.mxu0 0.0
    %1624 = vmatprep.subr.mxu0 0.0
    %1625 = vmatpush1.msra.mxu0 0.0
    %1626 = vmatprep.subr.mxu0 0.0
    %1627 = vmatpush1.msra.mxu0 0.0
    %1628 = vmatprep.subr.mxu0 0.0
    %1629 = vmatpush1.msra.mxu0 0.0
    %1630 = vmatprep.subr.mxu0 0.0
    %1631 = vmatpush1.msra.mxu0 0.0
    %1632 = vmatprep.subr.mxu0 0.0
    %1633 = vmatpush1.msra.mxu0 0.0
    %1634 = vmatprep.subr.mxu0 0.0
    %1635 = vmatpush1.msra.mxu0 0.0
    %1636 = vmatprep.subr.mxu0 0.0
    %1637 = vmatpush1.msra.mxu0 0.0
    %1638 = vmatprep.subr.mxu0 0.0
    %1639 = vmatpush1.msra.mxu0 %v118
    %1640 = vmatprep.subr.mxu0 0.0
    %1641 = vmatpush1.msra.mxu0 %v117
    %1642 = vmatprep.subr.mxu0 0.0
    %1643 = vmatpush1.msra.mxu0 %v116
    %1644 = vmatprep.subr.mxu0 0.0
    %1645 = vmatpush1.msra.mxu0 %v115
    %1646 = vmatprep.subr.mxu0 0.0
    %1647 = vmatpush2.msra.mxu0 0.0
    %1648 = vmatprep.subr.mxu0 0.0
    %1649 = vmatpush2.msra.mxu0 0.0
    %1650 = vmatprep.subr.mxu0 0.0
    %1651 = vmatpush2.msra.mxu0 0.0
    %1652 = vmatprep.subr.mxu0 0.0
    %1653 = vmatpush2.msra.mxu0 0.0
    %1654 = vmatprep.subr.mxu0 0.0
    %1655 = vmatpush2.msra.mxu0 0.0
    %1656 = vmatprep.subr.mxu0 0.0
    %1657 = vmatpush2.msra.mxu0 0.0
    %1658 = vmatprep.subr.mxu0 0.0
    %1659 = vmatpush2.msra.mxu0 0.0
    %1660 = vmatprep.subr.mxu0 0.0
    %1661 = vmatpush2.msra.mxu0 0.0
    %1662 = vmatprep.subr.mxu0 0.0
    %1663 = vmatpush2.msra.mxu0 0.0
    %1664 = vmatprep.subr.mxu0 0.0
    %1665 = vmatpush2.msra.mxu0 0.0
    %1666 = vmatprep.subr.mxu0 0.0
    %1667 = vmatpush2.msra.mxu0 0.0
    %1668 = vmatprep.subr.mxu0 0.0
    %1669 = vmatpush2.msra.mxu0 0.0
    %1670 = vmatprep.subr.mxu0 0.0
    %1671 = vmatpush2.msra.mxu0 0.0
    %1672 = vmatprep.subr.mxu0 0.0
    %1673 = vmatpush2.msra.mxu0 0.0
    %1674 = vmatprep.subr.mxu0 0.0
    %1675 = vmatpush2.msra.mxu0 0.0
    %1676 = vmatprep.subr.mxu0 0.0
    %1677 = vmatpush2.msra.mxu0 0.0
    %1678 = vmatprep.mubr.f32.mxu0 0.0
    %1679 = vmatmul.mubr.f32.gmra.mxu0 %v1612
    %v1680 = vpop.f32.mrf.mxu0
    %v1681 = vadd.f32 0.0, %v1680
    %v1682 = vpop.f32.mrf.mxu0
    %1683 = vdwg.mxu0
    %v1684 = vadd.f32 %v1608, %v1681
    %v1685 = vtanh.pop %v1684
    %1686 = vst.msk [vmem:[#allocation2 + $0xa] sm:$0x3] %vm564, %v1685
    %v1688 = vrot.slane %v1540, 4
    %v1689 = vsel %vm265, %v1688, 0
    %1691 = vmatprep.subr.mxu0 0.0
    %1692 = vmatpush1.msra.mxu0 0.0
    %1693 = vmatprep.subr.mxu0 0.0
    %1694 = vmatpush1.msra.mxu0 0.0
    %1695 = vmatprep.subr.mxu0 0.0
    %1696 = vmatpush1.msra.mxu0 0.0
    %1697 = vmatprep.subr.mxu0 0.0
    %1698 = vmatpush1.msra.mxu0 0.0
    %1699 = vmatprep.subr.mxu0 0.0
    %1700 = vmatpush1.msra.mxu0 0.0
    %1701 = vmatprep.subr.mxu0 0.0
    %1702 = vmatpush1.msra.mxu0 0.0
    %1703 = vmatprep.subr.mxu0 0.0
    %1704 = vmatpush1.msra.mxu0 0.0
    %1705 = vmatprep.subr.mxu0 0.0
    %1706 = vmatpush1.msra.mxu0 0.0
    %1707 = vmatprep.subr.mxu0 0.0
    %1708 = vmatpush1.msra.mxu0 0.0
    %1709 = vmatprep.subr.mxu0 0.0
    %1710 = vmatpush1.msra.mxu0 0.0
    %1711 = vmatprep.subr.mxu0 0.0
    %1712 = vmatpush1.msra.mxu0 0.0
    %1713 = vmatprep.subr.mxu0 0.0
    %1714 = vmatpush1.msra.mxu0 0.0
    %1715 = vmatprep.subr.mxu0 0.0
    %1716 = vmatpush1.msra.mxu0 %v114
    %1717 = vmatprep.subr.mxu0 0.0
    %1718 = vmatpush1.msra.mxu0 %v113
    %1719 = vmatprep.subr.mxu0 0.0
    %1720 = vmatpush1.msra.mxu0 %v112
    %1721 = vmatprep.subr.mxu0 0.0
    %1722 = vmatpush1.msra.mxu0 %v111
    %1723 = vmatprep.subr.mxu0 0.0
    %1724 = vmatpush2.msra.mxu0 0.0
    %1725 = vmatprep.subr.mxu0 0.0
    %1726 = vmatpush2.msra.mxu0 0.0
    %1727 = vmatprep.subr.mxu0 0.0
    %1728 = vmatpush2.msra.mxu0 0.0
    %1729 = vmatprep.subr.mxu0 0.0
    %1730 = vmatpush2.msra.mxu0 0.0
    %1731 = vmatprep.subr.mxu0 0.0
    %1732 = vmatpush2.msra.mxu0 0.0
    %1733 = vmatprep.subr.mxu0 0.0
    %1734 = vmatpush2.msra.mxu0 0.0
    %1735 = vmatprep.subr.mxu0 0.0
    %1736 = vmatpush2.msra.mxu0 0.0
    %1737 = vmatprep.subr.mxu0 0.0
    %1738 = vmatpush2.msra.mxu0 0.0
    %1739 = vmatprep.subr.mxu0 0.0
    %1740 = vmatpush2.msra.mxu0 0.0
    %1741 = vmatprep.subr.mxu0 0.0
    %1742 = vmatpush2.msra.mxu0 0.0
    %1743 = vmatprep.subr.mxu0 0.0
    %1744 = vmatpush2.msra.mxu0 0.0
    %1745 = vmatprep.subr.mxu0 0.0
    %1746 = vmatpush2.msra.mxu0 0.0
    %1747 = vmatprep.subr.mxu0 0.0
    %1748 = vmatpush2.msra.mxu0 0.0
    %1749 = vmatprep.subr.mxu0 0.0
    %1750 = vmatpush2.msra.mxu0 0.0
    %1751 = vmatprep.subr.mxu0 0.0
    %1752 = vmatpush2.msra.mxu0 0.0
    %1753 = vmatprep.subr.mxu0 0.0
    %1754 = vmatpush2.msra.mxu0 0.0
    %1755 = vmatprep.mubr.f32.mxu0 0.0
    %1756 = vmatmul.mubr.f32.gmra.mxu0 %v1689
    %v1757 = vpop.f32.mrf.mxu0
    %v1758 = vadd.f32 0.0, %v1757
    %v1759 = vpop.f32.mrf.mxu0
    %1760 = vdwg.mxu0
    %v1762 = vrot.slane %v1758, 2
    %v1764 = vadd.f32 %v259, %v1762
    %v1765 = vtanh.pop %v1764
    %1766 = vmatprep.subr.mxu0 0.0
    %1767 = vmatpush1.msra.mxu0 0.0
    %1768 = vmatprep.subr.mxu0 0.0
    %1769 = vmatpush1.msra.mxu0 0.0
    %1770 = vmatprep.subr.mxu0 0.0
    %1771 = vmatpush1.msra.mxu0 0.0
    %1772 = vmatprep.subr.mxu0 0.0
    %1773 = vmatpush1.msra.mxu0 0.0
    %1774 = vmatprep.subr.mxu0 0.0
    %1775 = vmatpush1.msra.mxu0 0.0
    %1776 = vmatprep.subr.mxu0 0.0
    %1777 = vmatpush1.msra.mxu0 0.0
    %1778 = vmatprep.subr.mxu0 0.0
    %1779 = vmatpush1.msra.mxu0 0.0
    %1780 = vmatprep.subr.mxu0 0.0
    %1781 = vmatpush1.msra.mxu0 0.0
    %1782 = vmatprep.subr.mxu0 0.0
    %1783 = vmatpush1.msra.mxu0 0.0
    %1784 = vmatprep.subr.mxu0 0.0
    %1785 = vmatpush1.msra.mxu0 0.0
    %1786 = vmatprep.subr.mxu0 0.0
    %1787 = vmatpush1.msra.mxu0 0.0
    %1788 = vmatprep.subr.mxu0 0.0
    %1789 = vmatpush1.msra.mxu0 0.0
    %1790 = vmatprep.subr.mxu0 0.0
    %1791 = vmatpush1.msra.mxu0 %v110
    %1792 = vmatprep.subr.mxu0 0.0
    %1793 = vmatpush1.msra.mxu0 %v109
    %1794 = vmatprep.subr.mxu0 0.0
    %1795 = vmatpush1.msra.mxu0 %v108
    %1796 = vmatprep.subr.mxu0 0.0
    %1797 = vmatpush1.msra.mxu0 %v107
    %1798 = vmatprep.subr.mxu0 0.0
    %1799 = vmatpush2.msra.mxu0 0.0
    %1800 = vmatprep.subr.mxu0 0.0
    %1801 = vmatpush2.msra.mxu0 0.0
    %1802 = vmatprep.subr.mxu0 0.0
    %1803 = vmatpush2.msra.mxu0 0.0
    %1804 = vmatprep.subr.mxu0 0.0
    %1805 = vmatpush2.msra.mxu0 0.0
    %1806 = vmatprep.subr.mxu0 0.0
    %1807 = vmatpush2.msra.mxu0 0.0
    %1808 = vmatprep.subr.mxu0 0.0
    %1809 = vmatpush2.msra.mxu0 0.0
    %1810 = vmatprep.subr.mxu0 0.0
    %1811 = vmatpush2.msra.mxu0 0.0
    %1812 = vmatprep.subr.mxu0 0.0
    %1813 = vmatpush2.msra.mxu0 0.0
    %1814 = vmatprep.subr.mxu0 0.0
    %1815 = vmatpush2.msra.mxu0 0.0
    %1816 = vmatprep.subr.mxu0 0.0
    %1817 = vmatpush2.msra.mxu0 0.0
    %1818 = vmatprep.subr.mxu0 0.0
    %1819 = vmatpush2.msra.mxu0 0.0
    %1820 = vmatprep.subr.mxu0 0.0
    %1821 = vmatpush2.msra.mxu0 0.0
    %1822 = vmatprep.subr.mxu0 0.0
    %1823 = vmatpush2.msra.mxu0 0.0
    %1824 = vmatprep.subr.mxu0 0.0
    %1825 = vmatpush2.msra.mxu0 0.0
    %1826 = vmatprep.subr.mxu0 0.0
    %1827 = vmatpush2.msra.mxu0 0.0
    %1828 = vmatprep.subr.mxu0 0.0
    %1829 = vmatpush2.msra.mxu0 0.0
    %1830 = vmatprep.mubr.f32.mxu0 0.0
    %1831 = vmatmul.mubr.f32.gmra.mxu0 %v1689
    %v1832 = vpop.f32.mrf.mxu0
    %v1833 = vadd.f32 %v125, %v1832
    %v1834 = vpop.f32.mrf.mxu0
    %1835 = vdwg.mxu0
    %v1837 = vsel %vm265, %v1685, 0
    %1839 = vmatprep.subr.mxu0 0.0
    %1840 = vmatpush1.msra.mxu0 0.0
    %1841 = vmatprep.subr.mxu0 0.0
    %1842 = vmatpush1.msra.mxu0 0.0
    %1843 = vmatprep.subr.mxu0 0.0
    %1844 = vmatpush1.msra.mxu0 0.0
    %1845 = vmatprep.subr.mxu0 0.0
    %1846 = vmatpush1.msra.mxu0 0.0
    %1847 = vmatprep.subr.mxu0 0.0
    %1848 = vmatpush1.msra.mxu0 0.0
    %1849 = vmatprep.subr.mxu0 0.0
    %1850 = vmatpush1.msra.mxu0 0.0
    %1851 = vmatprep.subr.mxu0 0.0
    %1852 = vmatpush1.msra.mxu0 0.0
    %1853 = vmatprep.subr.mxu0 0.0
    %1854 = vmatpush1.msra.mxu0 0.0
    %1855 = vmatprep.subr.mxu0 0.0
    %1856 = vmatpush1.msra.mxu0 0.0
    %1857 = vmatprep.subr.mxu0 0.0
    %1858 = vmatpush1.msra.mxu0 0.0
    %1859 = vmatprep.subr.mxu0 0.0
    %1860 = vmatpush1.msra.mxu0 0.0
    %1861 = vmatprep.subr.mxu0 0.0
    %1862 = vmatpush1.msra.mxu0 0.0
    %1863 = vmatprep.subr.mxu0 0.0
    %1864 = vmatpush1.msra.mxu0 %v118
    %1865 = vmatprep.subr.mxu0 0.0
    %1866 = vmatpush1.msra.mxu0 %v117
    %1867 = vmatprep.subr.mxu0 0.0
    %1868 = vmatpush1.msra.mxu0 %v116
    %1869 = vmatprep.subr.mxu0 0.0
    %1870 = vmatpush1.msra.mxu0 %v115
    %1871 = vmatprep.subr.mxu0 0.0
    %1872 = vmatpush2.msra.mxu0 0.0
    %1873 = vmatprep.subr.mxu0 0.0
    %1874 = vmatpush2.msra.mxu0 0.0
    %1875 = vmatprep.subr.mxu0 0.0
    %1876 = vmatpush2.msra.mxu0 0.0
    %1877 = vmatprep.subr.mxu0 0.0
    %1878 = vmatpush2.msra.mxu0 0.0
    %1879 = vmatprep.subr.mxu0 0.0
    %1880 = vmatpush2.msra.mxu0 0.0
    %1881 = vmatprep.subr.mxu0 0.0
    %1882 = vmatpush2.msra.mxu0 0.0
    %1883 = vmatprep.subr.mxu0 0.0
    %1884 = vmatpush2.msra.mxu0 0.0
    %1885 = vmatprep.subr.mxu0 0.0
    %1886 = vmatpush2.msra.mxu0 0.0
    %1887 = vmatprep.subr.mxu0 0.0
    %1888 = vmatpush2.msra.mxu0 0.0
    %1889 = vmatprep.subr.mxu0 0.0
    %1890 = vmatpush2.msra.mxu0 0.0
    %1891 = vmatprep.subr.mxu0 0.0
    %1892 = vmatpush2.msra.mxu0 0.0
    %1893 = vmatprep.subr.mxu0 0.0
    %1894 = vmatpush2.msra.mxu0 0.0
    %1895 = vmatprep.subr.mxu0 0.0
    %1896 = vmatpush2.msra.mxu0 0.0
    %1897 = vmatprep.subr.mxu0 0.0
    %1898 = vmatpush2.msra.mxu0 0.0
    %1899 = vmatprep.subr.mxu0 0.0
    %1900 = vmatpush2.msra.mxu0 0.0
    %1901 = vmatprep.subr.mxu0 0.0
    %1902 = vmatpush2.msra.mxu0 0.0
    %1903 = vmatprep.mubr.f32.mxu0 0.0
    %1904 = vmatmul.mubr.f32.gmra.mxu0 %v1837
    %v1905 = vpop.f32.mrf.mxu0
    %v1906 = vadd.f32 0.0, %v1905
    %v1907 = vpop.f32.mrf.mxu0
    %1908 = vdwg.mxu0
    %v1909 = vadd.f32 %v1833, %v1906
    %v1910 = vtanh.pop %v1909
    %1911 = vst.msk [vmem:[#allocation2 + $0xc] sm:$0x3] %vm564, %v1910
    %v1913 = vrot.slane %v1765, 6
    %v1914 = vsel %vm265, %v1913, 0
    %1916 = vmatprep.subr.mxu0 0.0
    %1917 = vmatpush1.msra.mxu0 0.0
    %1918 = vmatprep.subr.mxu0 0.0
    %1919 = vmatpush1.msra.mxu0 0.0
    %1920 = vmatprep.subr.mxu0 0.0
    %1921 = vmatpush1.msra.mxu0 0.0
    %1922 = vmatprep.subr.mxu0 0.0
    %1923 = vmatpush1.msra.mxu0 0.0
    %1924 = vmatprep.subr.mxu0 0.0
    %1925 = vmatpush1.msra.mxu0 0.0
    %1926 = vmatprep.subr.mxu0 0.0
    %1927 = vmatpush1.msra.mxu0 0.0
    %1928 = vmatprep.subr.mxu0 0.0
    %1929 = vmatpush1.msra.mxu0 0.0
    %1930 = vmatprep.subr.mxu0 0.0
    %1931 = vmatpush1.msra.mxu0 0.0
    %1932 = vmatprep.subr.mxu0 0.0
    %1933 = vmatpush1.msra.mxu0 0.0
    %1934 = vmatprep.subr.mxu0 0.0
    %1935 = vmatpush1.msra.mxu0 0.0
    %1936 = vmatprep.subr.mxu0 0.0
    %1937 = vmatpush1.msra.mxu0 0.0
    %1938 = vmatprep.subr.mxu0 0.0
    %1939 = vmatpush1.msra.mxu0 0.0
    %1940 = vmatprep.subr.mxu0 0.0
    %1941 = vmatpush1.msra.mxu0 %v110
    %1942 = vmatprep.subr.mxu0 0.0
    %1943 = vmatpush1.msra.mxu0 %v109
    %1944 = vmatprep.subr.mxu0 0.0
    %1945 = vmatpush1.msra.mxu0 %v108
    %1946 = vmatprep.subr.mxu0 0.0
    %1947 = vmatpush1.msra.mxu0 %v107
    %1948 = vmatprep.subr.mxu0 0.0
    %1949 = vmatpush2.msra.mxu0 0.0
    %1950 = vmatprep.subr.mxu0 0.0
    %1951 = vmatpush2.msra.mxu0 0.0
    %1952 = vmatprep.subr.mxu0 0.0
    %1953 = vmatpush2.msra.mxu0 0.0
    %1954 = vmatprep.subr.mxu0 0.0
    %1955 = vmatpush2.msra.mxu0 0.0
    %1956 = vmatprep.subr.mxu0 0.0
    %1957 = vmatpush2.msra.mxu0 0.0
    %1958 = vmatprep.subr.mxu0 0.0
    %1959 = vmatpush2.msra.mxu0 0.0
    %1960 = vmatprep.subr.mxu0 0.0
    %1961 = vmatpush2.msra.mxu0 0.0
    %1962 = vmatprep.subr.mxu0 0.0
    %1963 = vmatpush2.msra.mxu0 0.0
    %1964 = vmatprep.subr.mxu0 0.0
    %1965 = vmatpush2.msra.mxu0 0.0
    %1966 = vmatprep.subr.mxu0 0.0
    %1967 = vmatpush2.msra.mxu0 0.0
    %1968 = vmatprep.subr.mxu0 0.0
    %1969 = vmatpush2.msra.mxu0 0.0
    %1970 = vmatprep.subr.mxu0 0.0
    %1971 = vmatpush2.msra.mxu0 0.0
    %1972 = vmatprep.subr.mxu0 0.0
    %1973 = vmatpush2.msra.mxu0 0.0
    %1974 = vmatprep.subr.mxu0 0.0
    %1975 = vmatpush2.msra.mxu0 0.0
    %1976 = vmatprep.subr.mxu0 0.0
    %1977 = vmatpush2.msra.mxu0 0.0
    %1978 = vmatprep.subr.mxu0 0.0
    %1979 = vmatpush2.msra.mxu0 0.0
    %1980 = vmatprep.mubr.f32.mxu0 0.0
    %1981 = vmatmul.mubr.f32.gmra.mxu0 %v1914
    %v1982 = vpop.f32.mrf.mxu0
    %v1983 = vadd.f32 %v125, %v1982
    %v1984 = vpop.f32.mrf.mxu0
    %1985 = vdwg.mxu0
    %v1987 = vsel %vm265, %v1910, 0
    %1989 = vmatprep.subr.mxu0 0.0
    %1990 = vmatpush1.msra.mxu0 0.0
    %1991 = vmatprep.subr.mxu0 0.0
    %1992 = vmatpush1.msra.mxu0 0.0
    %1993 = vmatprep.subr.mxu0 0.0
    %1994 = vmatpush1.msra.mxu0 0.0
    %1995 = vmatprep.subr.mxu0 0.0
    %1996 = vmatpush1.msra.mxu0 0.0
    %1997 = vmatprep.subr.mxu0 0.0
    %1998 = vmatpush1.msra.mxu0 0.0
    %1999 = vmatprep.subr.mxu0 0.0
    %2000 = vmatpush1.msra.mxu0 0.0
    %2001 = vmatprep.subr.mxu0 0.0
    %2002 = vmatpush1.msra.mxu0 0.0
    %2003 = vmatprep.subr.mxu0 0.0
    %2004 = vmatpush1.msra.mxu0 0.0
    %2005 = vmatprep.subr.mxu0 0.0
    %2006 = vmatpush1.msra.mxu0 0.0
    %2007 = vmatprep.subr.mxu0 0.0
    %2008 = vmatpush1.msra.mxu0 0.0
    %2009 = vmatprep.subr.mxu0 0.0
    %2010 = vmatpush1.msra.mxu0 0.0
    %2011 = vmatprep.subr.mxu0 0.0
    %2012 = vmatpush1.msra.mxu0 0.0
    %2013 = vmatprep.subr.mxu0 0.0
    %2014 = vmatpush1.msra.mxu0 %v118
    %2015 = vmatprep.subr.mxu0 0.0
    %2016 = vmatpush1.msra.mxu0 %v117
    %2017 = vmatprep.subr.mxu0 0.0
    %2018 = vmatpush1.msra.mxu0 %v116
    %2019 = vmatprep.subr.mxu0 0.0
    %2020 = vmatpush1.msra.mxu0 %v115
    %2021 = vmatprep.subr.mxu0 0.0
    %2022 = vmatpush2.msra.mxu0 0.0
    %2023 = vmatprep.subr.mxu0 0.0
    %2024 = vmatpush2.msra.mxu0 0.0
    %2025 = vmatprep.subr.mxu0 0.0
    %2026 = vmatpush2.msra.mxu0 0.0
    %2027 = vmatprep.subr.mxu0 0.0
    %2028 = vmatpush2.msra.mxu0 0.0
    %2029 = vmatprep.subr.mxu0 0.0
    %2030 = vmatpush2.msra.mxu0 0.0
    %2031 = vmatprep.subr.mxu0 0.0
    %2032 = vmatpush2.msra.mxu0 0.0
    %2033 = vmatprep.subr.mxu0 0.0
    %2034 = vmatpush2.msra.mxu0 0.0
    %2035 = vmatprep.subr.mxu0 0.0
    %2036 = vmatpush2.msra.mxu0 0.0
    %2037 = vmatprep.subr.mxu0 0.0
    %2038 = vmatpush2.msra.mxu0 0.0
    %2039 = vmatprep.subr.mxu0 0.0
    %2040 = vmatpush2.msra.mxu0 0.0
    %2041 = vmatprep.subr.mxu0 0.0
    %2042 = vmatpush2.msra.mxu0 0.0
    %2043 = vmatprep.subr.mxu0 0.0
    %2044 = vmatpush2.msra.mxu0 0.0
    %2045 = vmatprep.subr.mxu0 0.0
    %2046 = vmatpush2.msra.mxu0 0.0
    %2047 = vmatprep.subr.mxu0 0.0
    %2048 = vmatpush2.msra.mxu0 0.0
    %2049 = vmatprep.subr.mxu0 0.0
    %2050 = vmatpush2.msra.mxu0 0.0
    %2051 = vmatprep.subr.mxu0 0.0
    %2052 = vmatpush2.msra.mxu0 0.0
    %2053 = vmatprep.mubr.f32.mxu0 0.0
    %2054 = vmatmul.mubr.f32.gmra.mxu0 %v1987
    %v2055 = vpop.f32.mrf.mxu0
    %v2056 = vadd.f32 0.0, %v2055
    %v2057 = vpop.f32.mrf.mxu0
    %2058 = vdwg.mxu0
    %v2059 = vadd.f32 %v1983, %v2056
    %v2060 = vtanh.pop %v2059
    %2061 = vst.msk [vmem:[#allocation2 + $0xe] sm:$0x3] %vm564, %v2060
    %vm2062 = vcmask 261126
    %2063 = vst.msk [vmem:[#allocation13 - $0x6] sm:$0xc0] %vm2062, %v1765
    %s2064 = scalar_lea.vmem [#allocation13], 2
    %2065 = vst.msk [vmem:[%s2064] sm:$0x3] %vm564, %v2060
    %v2066 = vld [vmem:[#allocation2] sm:$0xff]
    %v2067 = vld [vmem:[#allocation2 + $0x8] sm:$0xff]
    %v2068 = vld [vmem:[%s8] sm:$0xff]
    %v2069 = vld [vmem:[%s8 + $0x8] sm:$0xff]
    %v2070 = vld [vmem:[%s8 + $0x10] sm:$0xff]
    %v2071 = vld [vmem:[%s8 + $0x18] sm:$0xff]
    %v2072 = vld [vmem:[#allocation11] sm:$0x1]
    %v2074 = vlaneseq
    %v2075 = vshrl.u32 %v2074, 7
    %v2076 = vsub.s32 0, %v2075
    %v2077 = vrot.slane %v2072, %v2076
    %v2080 = vsel %vm265, %v2066, 0
    %v2083 = vsel %vm265, %v2067, 0
    %2085 = vmatprep.subr.mxu0 0.0
    %2086 = vmatpush1.msra.mxu0 0.0
    %2087 = vmatprep.subr.mxu0 0.0
    %2088 = vmatpush1.msra.mxu0 0.0
    %2089 = vmatprep.subr.mxu0 0.0
    %2090 = vmatpush1.msra.mxu0 0.0
    %2091 = vmatprep.subr.mxu0 0.0
    %2092 = vmatpush1.msra.mxu0 0.0
    %2093 = vmatprep.subr.mxu0 0.0
    %2094 = vmatpush1.msra.mxu0 0.0
    %2095 = vmatprep.subr.mxu0 0.0
    %2096 = vmatpush1.msra.mxu0 0.0
    %2097 = vmatprep.subr.mxu0 0.0
    %2098 = vmatpush1.msra.mxu0 0.0
    %2099 = vmatprep.subr.mxu0 0.0
    %2100 = vmatpush1.msra.mxu0 0.0
    %2101 = vmatprep.subr.mxu0 0.0
    %2102 = vmatpush1.msra.mxu0 0.0
    %2103 = vmatprep.subr.mxu0 0.0
    %2104 = vmatpush1.msra.mxu0 0.0
    %2105 = vmatprep.subr.mxu0 0.0
    %2106 = vmatpush1.msra.mxu0 0.0
    %2107 = vmatprep.subr.mxu0 0.0
    %2108 = vmatpush1.msra.mxu0 0.0
    %2109 = vmatprep.subr.mxu0 0.0
    %2110 = vmatpush1.msra.mxu0 %v2071
    %2111 = vmatprep.subr.mxu0 0.0
    %2112 = vmatpush1.msra.mxu0 %v2070
    %2113 = vmatprep.subr.mxu0 0.0
    %2114 = vmatpush1.msra.mxu0 %v2069
    %2115 = vmatprep.subr.mxu0 0.0
    %2116 = vmatpush1.msra.mxu0 %v2068
    %2117 = vmatprep.subr.mxu0 0.0
    %2118 = vmatpush2.msra.mxu0 0.0
    %2119 = vmatprep.subr.mxu0 0.0
    %2120 = vmatpush2.msra.mxu0 0.0
    %2121 = vmatprep.subr.mxu0 0.0
    %2122 = vmatpush2.msra.mxu0 0.0
    %2123 = vmatprep.subr.mxu0 0.0
    %2124 = vmatpush2.msra.mxu0 0.0
    %2125 = vmatprep.subr.mxu0 0.0
    %2126 = vmatpush2.msra.mxu0 0.0
    %2127 = vmatprep.subr.mxu0 0.0
    %2128 = vmatpush2.msra.mxu0 0.0
    %2129 = vmatprep.subr.mxu0 0.0
    %2130 = vmatpush2.msra.mxu0 0.0
    %2131 = vmatprep.subr.mxu0 0.0
    %2132 = vmatpush2.msra.mxu0 0.0
    %2133 = vmatprep.subr.mxu0 0.0
    %2134 = vmatpush2.msra.mxu0 0.0
    %2135 = vmatprep.subr.mxu0 0.0
    %2136 = vmatpush2.msra.mxu0 0.0
    %2137 = vmatprep.subr.mxu0 0.0
    %2138 = vmatpush2.msra.mxu0 0.0
    %2139 = vmatprep.subr.mxu0 0.0
    %2140 = vmatpush2.msra.mxu0 0.0
    %2141 = vmatprep.subr.mxu0 0.0
    %2142 = vmatpush2.msra.mxu0 0.0
    %2143 = vmatprep.subr.mxu0 0.0
    %2144 = vmatpush2.msra.mxu0 0.0
    %2145 = vmatprep.subr.mxu0 0.0
    %2146 = vmatpush2.msra.mxu0 0.0
    %2147 = vmatprep.subr.mxu0 0.0
    %2148 = vmatpush2.msra.mxu0 0.0
    %2149 = vmatprep.mubr.f32.mxu0 0.0
    %2150 = vmatmul.mubr.f32.gmra.mxu0 %v2080
    %v2151 = vpop.f32.mrf.mxu0
    %v2152 = vadd.f32 %v2077, %v2151
    %v2153 = vpop.f32.mrf.mxu0
    %2154 = vmatprep.mubr.f32.mxu0 0.0
    %2155 = vmatmul.mubr.f32.gmra.mxu0 %v2083
    %v2156 = vpop.f32.mrf.mxu0
    %v2157 = vadd.f32 %v2077, %v2156
    %v2158 = vpop.f32.mrf.mxu0
    %2159 = vdwg.mxu0
    %vm2160 = vcmask 64512
    %v2161 = vsel %vm2160, %v2152, -inf
    %2162 = vmax.xlane.f32.xlu0 %v2161
    %v2163 = vpop.xlane.xlu0 %2162
    %v2164 = vsel %vm2160, %v2157, -inf
    %2165 = vmax.xlane.f32.xlu0 %v2164
    %v2166 = vpop.xlane.xlu0 %2165
    %v2167 = vsub.f32 %v2152, %v2163
    %v2168 = vsub.f32 %v2157, %v2166
    %v2169 = vmul.f32 %v2167, 1.442695
    %v2170 = vpow.pop %v2169
    %v2171 = vmul.f32 %v2168, 1.442695
    %v2172 = vpow.pop %v2171
    %v2173 = vsel %vm2160, %v2170, 0.0
    %2174 = vadd.xlane.f32.xlu0 %v2173
    %v2175 = vpop.xlane.xlu0 %2174
    %v2176 = vsel %vm2160, %v2172, 0.0
    %2177 = vadd.xlane.f32.xlu0 %v2176
    %v2178 = vpop.xlane.xlu0 %2177
    %v2179 = vrcp.pop %v2175
    %v2180 = vrcp.pop %v2178
    %v2181 = vmul.f32 %v2170, %v2179
    %v2182 = vmul.f32 %v2172, %v2180
    %v2185 = vcombine.high %v2181, %v2181
    %v2187 = vunpack.c.l.s4 1983009808
    %v2188 = vunpack.c.0.s8 %v2187
    %v2189 = vlaneseq
    %v2190 = vshrl.u32 %v2189, 7
    %v2191 = vsub.s32 %v2188, %v2190
    %v2192 = vrot.slane %v2181, %v2191
    %v2194 = vunpack.c.l.s4 1983009808
    %v2195 = vunpack.c.0.s8 %v2194
    %v2196 = vlaneseq
    %v2197 = vshrl.u32 %v2196, 7
    %v2198 = vsub.s32 %v2195, %v2197
    %v2199 = vrot.slane %v2185, %v2198
    %v2200 = vcombine.high %v2192, %v2192
    %v2201 = vcombine.high %v2199, %v2199
    %v2202 = vcombine.high %v2182, %v2182
    %v2204 = vunpack.c.l.s4 1983009808
    %v2205 = vunpack.c.0.s8 %v2204
    %v2206 = vlaneseq
    %v2207 = vshrl.u32 %v2206, 7
    %v2208 = vsub.s32 %v2205, %v2207
    %v2209 = vrot.slane %v2182, %v2208
    %v2211 = vunpack.c.l.s4 1983009808
    %v2212 = vunpack.c.0.s8 %v2211
    %v2213 = vlaneseq
    %v2214 = vshrl.u32 %v2213, 7
    %v2215 = vsub.s32 %v2212, %v2214
    %v2216 = vrot.slane %v2202, %v2215
    %v2217 = vcombine.high %v2209, %v2209
    %v2218 = vcombine.high %v2216, %v2216
    %v2219 = vlaneseq
    %v2220 = vshrl.u32 %v2219, 7
    %v2221 = vsub.s32 0, %v2220
    %v2222 = vrot.slane %v2192, %v2221
    %v2223 = vlaneseq
    %v2224 = vshrl.u32 %v2223, 7
    %v2225 = vsub.s32 0, %v2224
    %v2226 = vrot.slane %v2200, %v2225
    %v2227 = vlaneseq
    %v2228 = vshrl.u32 %v2227, 7
    %v2229 = vsub.s32 0, %v2228
    %v2230 = vrot.slane %v2199, %v2229
    %v2231 = vlaneseq
    %v2232 = vshrl.u32 %v2231, 7
    %v2233 = vsub.s32 0, %v2232
    %v2234 = vrot.slane %v2201, %v2233
    %v2235 = vlaneseq
    %v2236 = vshrl.u32 %v2235, 7
    %v2237 = vsub.s32 0, %v2236
    %v2238 = vrot.slane %v2209, %v2237
    %v2239 = vlaneseq
    %v2240 = vshrl.u32 %v2239, 7
    %v2241 = vsub.s32 0, %v2240
    %v2242 = vrot.slane %v2217, %v2241
    %v2243 = vlaneseq
    %v2244 = vshrl.u32 %v2243, 7
    %v2245 = vsub.s32 0, %v2244
    %v2246 = vrot.slane %v2216, %v2245
    %v2247 = vlaneseq
    %v2248 = vshrl.u32 %v2247, 7
    %v2249 = vsub.s32 0, %v2248
    %v2250 = vrot.slane %v2218, %v2249
    %v2251 = vsel %vm132, %v2226, %v2222
    %vm2252 = vcmask 1042434
    %v2253 = vsel %vm2252, %v2230, %v2251
    %v2254 = vsel %vm137, %v2234, %v2253
    %vm2255 = vcmask 1044484
    %v2256 = vsel %vm2255, %v2238, %v2254
    %v2257 = vsel %vm142, %v2242, %v2256
    %vm2258 = vcmask 1046534
    %v2259 = vsel %vm2258, %v2246, %v2257
    %v2260 = vsel %vm147, %v2250, %v2259
    %v2262 = vlaneseq
    %v2263 = vshrl.u32 %v2262, 7
    %v2264 = vsub.s32 1, %v2263
    %v2265 = vrot.slane %v2192, %v2264
    %v2266 = vlaneseq
    %v2267 = vshrl.u32 %v2266, 7
    %v2268 = vsub.s32 1, %v2267
    %v2269 = vrot.slane %v2200, %v2268
    %v2270 = vlaneseq
    %v2271 = vshrl.u32 %v2270, 7
    %v2272 = vsub.s32 1, %v2271
    %v2273 = vrot.slane %v2199, %v2272
    %v2274 = vlaneseq
    %v2275 = vshrl.u32 %v2274, 7
    %v2276 = vsub.s32 1, %v2275
    %v2277 = vrot.slane %v2201, %v2276
    %v2278 = vlaneseq
    %v2279 = vshrl.u32 %v2278, 7
    %v2280 = vsub.s32 1, %v2279
    %v2281 = vrot.slane %v2209, %v2280
    %v2282 = vlaneseq
    %v2283 = vshrl.u32 %v2282, 7
    %v2284 = vsub.s32 1, %v2283
    %v2285 = vrot.slane %v2217, %v2284
    %v2286 = vlaneseq
    %v2287 = vshrl.u32 %v2286, 7
    %v2288 = vsub.s32 1, %v2287
    %v2289 = vrot.slane %v2216, %v2288
    %v2290 = vlaneseq
    %v2291 = vshrl.u32 %v2290, 7
    %v2292 = vsub.s32 1, %v2291
    %v2293 = vrot.slane %v2218, %v2292
    %v2294 = vsel %vm132, %v2269, %v2265
    %v2295 = vsel %vm2252, %v2273, %v2294
    %v2296 = vsel %vm137, %v2277, %v2295
    %v2297 = vsel %vm2255, %v2281, %v2296
    %v2298 = vsel %vm142, %v2285, %v2297
    %v2299 = vsel %vm2258, %v2289, %v2298
    %v2300 = vsel %vm147, %v2293, %v2299
    %2302 = vst.msk [vmem:[#allocation12] sm:$0xff] %vm2160, %v2260
    %2303 = vst.msk [vmem:[#allocation12 + $0x8] sm:$0xff] %vm2160, %v2300
    // Predicated region
    $region62: #{rc_sense_model2_forward.1} parent=1 // pred_check
      _
    $region63: #{rc_sense_model2_forward.1} parent=1 // pred_check_branch
      %2305 = sbr.rel (0) target = $region65
    $region64: #{rc_sense_model2_forward.1} parent=1 // pred_region
      %s2307 = ssub.s32 256, 256
      %2308 = vsyncadd [#allocation5], %s2307
      %s2309 = sshll.u32 [#allocation12], 4
      %s2310 = int_to_ptr.vmem [resolvable:$true] %s2309
      %2315 = dma.vmem_to_hbm [thread:$0]  %s2310, 256, %s10, [#allocation5], 128, 128, 8
    $region65: #{rc_sense_model2_forward.1} parent=1 // pred_fallthru
      _
    // Predicated region
    $region66: #{rc_sense_model2_forward.1} parent=1 // pred_check
      _
    $region67: #{rc_sense_model2_forward.1} parent=1 // pred_check_branch
      %2317 = sbr.rel (0) target = $region69
    $region68: #{rc_sense_model2_forward.1} parent=1 // pred_region
      %s2319 = ssub.s32 64, 64
      %2320 = vsyncadd [#allocation14], %s2319
      %s2321 = sshll.u32 [#allocation13], 4
      %s2322 = int_to_ptr.vmem [resolvable:$true] %s2321
      %2327 = dma.vmem_to_hbm [thread:$0]  %s2322, 64, %s11, [#allocation14], 32, 32, 2
    $region69: #{rc_sense_model2_forward.1} parent=1 // pred_fallthru
      _
    // Predicated region
    $region70: #{rc_sense_model2_forward.1} parent=1 // pred_check
      _
    $region71: #{rc_sense_model2_forward.1} parent=1 // pred_check_branch
      %2329 = sbr.rel (0) target = $region73
    $region72: #{rc_sense_model2_forward.1} parent=1 // pred_region
      %2330 = dma.done [#allocation5], 256
    $region73: #{rc_sense_model2_forward.1} parent=1 // pred_fallthru
      _
    // Predicated region
    $region74: #{rc_sense_model2_forward.1} parent=1 // pred_check
      _
    $region75: #{rc_sense_model2_forward.1} parent=1 // pred_check_branch
      %2332 = sbr.rel (0) target = $region77
    $region76: #{rc_sense_model2_forward.1} parent=1 // pred_region
      %2333 = dma.done [#allocation14], 64
    $region77: #{rc_sense_model2_forward.1} parent=1 // pred_fallthru
      _
    %2334 = vsyncpa [#allocation4], 1
    %2335 = vsyncpa [#allocation7], 1
    %2336 = vsyncpa [#allocation10], 1
    %2337 = vsyncpa [#allocation5], 1
    %2338 = vsyncpa [#allocation14], 1

</llo_original>
